<compile_context>
chip_gen: v7x
topology: tpu7x:2x2x1
jax: 0.10.0
libtpu: 0.0.40
codegen_flags: <defaults>
</compile_context>

<pallas_src>
import functools

import jax
import jax.numpy as jnp
import numpy as np
from jax import lax
from jax.experimental import pallas as pl
from jax.experimental.pallas import tpu as pltpu


# ----------------------------- fused QKV projection -----------------------------

def _qkv_proj_kernel(x_ref, w_ref, b_ref, q_ref, kv_ref, *, dim, compute_dtype):
    # x_ref:  (1, D, TM)   native channels-first block of x
    # w_ref:  (D, 3D)      fused [Wq | Wk | Wv], stored (in, out); resident in VMEM
    # b_ref:  (1, 3D)      fused bias, f32
    # q_ref:  (1, TM, D)   Q projection (channels-last)
    # kv_ref: (1, TM, 2D)  K|V projections fused for single-DMA consumption
    x = x_ref[0].astype(compute_dtype)                       # (D, TM)
    w = w_ref[...].astype(compute_dtype)                     # (D, 3D)
    # x^T @ W expressed as a contraction over D of both operands.  This kernel is
    # matmul-bound (2*TM*D*3D flops per tile), so any per-tile layout fixup Mosaic
    # inserts for the transposed LHS is amortized away.
    acc = lax.dot_general(x, w, (((0,), (0,)), ((), ())),
                          preferred_element_type=jnp.float32)  # (TM, 3D) f32
    acc = acc + b_ref[...]
    q_ref[0] = acc[:, :dim].astype(q_ref.dtype)
    kv_ref[0] = acc[:, dim:].astype(kv_ref.dtype)


# ------------------------- flash attention (online softmax) ----------------------

def _flash_attn_kernel(q_ref, kv_ref, o_ref, m_sc, l_sc, acc_sc, *,
                       dim, compute_dtype, approx_recip):
    # q_ref:  (1, TQ, D); kv_ref: (1, TK, 2D); o_ref: (1, D, TQ)  (native output layout)
    # Scratch persists across the ki axis: m_sc/l_sc (TQ, 1) f32, acc_sc (TQ, D) f32.
    ki = pl.program_id(2)

    @pl.when(ki == 0)
    def _():
        m_sc[...] = jnp.full_like(m_sc, -jnp.inf)
        l_sc[...] = jnp.zeros_like(l_sc)
        acc_sc[...] = jnp.zeros_like(acc_sc)

    q = q_ref[0].astype(compute_dtype)                        # (TQ, D)
    kv = kv_ref[0]                                            # (TK, 2D)
    k = kv[:, :dim].astype(compute_dtype)                     # (TK, D)
    v = kv[:, dim:].astype(compute_dtype)                     # (TK, D)

    # s[q, k] = sum_d Q[q, d] * K[k, d]  (unscaled, matching the module).
    # Standard MXU orientation (rhs-transposed contraction); f32 scores.
    s = lax.dot_general(q, k, (((1,), (1,)), ((), ())),
                        preferred_element_type=jnp.float32)   # (TQ, TK) f32

    m_prev = m_sc[...]                                        # (TQ, 1)
    m_new = jnp.maximum(m_prev, jnp.max(s, axis=-1, keepdims=True))
    alpha = jnp.exp(m_prev - m_new)                           # (TQ, 1)
    p = jnp.exp(s - m_new)                                    # (TQ, TK) f32
    l_sc[...] = alpha * l_sc[...] + jnp.sum(p, axis=-1, keepdims=True)
    # acc[q, d] += sum_k P[q, k] * V[k, d]   (standard orientation, f32 accumulation)
    pv = lax.dot_general(p.astype(compute_dtype), v, (((1,), (0,)), ((), ())),
                         preferred_element_type=jnp.float32)  # (TQ, D) f32
    acc_sc[...] = alpha * acc_sc[...] + pv
    m_sc[...] = m_new

    @pl.when(ki == pl.num_programs(2) - 1)
    def _():
        # TODO(synk): dropout_rate=0.0 -> identity; a nonzero rate would need
        # pltpu.prng_seed + pltpu.stateful_bernoulli masking on the attention probs.
        inv_l = pl.reciprocal(l_sc[...], approx=approx_recip)  # (TQ, 1)
        out = acc_sc[...] * inv_l                              # (TQ, D) f32
        # Single per-query-tile transpose into the native channels-first layout.
        o_ref[0] = jnp.transpose(out).astype(o_ref.dtype)      # (D, TQ)


# ------------------------------------ wrapper -------------------------------------

def _pick_seq_tile(seq_len, target):
    """Largest tile <= target that is either the full length or a 128-multiple divisor."""
    if seq_len <= target:
        return seq_len
    t = (target // 128) * 128
    while t >= 128:
        if seq_len % t == 0:
            return t
        t -= 128
    raise ValueError("sequence length must be <= tile target or divisible by 128")


def _split_for_megacore(batch, seq, tile):
    # v7x has 2 TensorCores; keep at least 2 'parallel' grid steps so the compiler
    # can shard the parallel axes across both cores.
    if batch * (seq // tile) < 2 and tile % 256 == 0:
        return tile // 2
    return tile


def _vmem_limit(nbytes):
    # Explicit scoped-VMEM limit: 2x the estimated footprint, clamped to [32, 128] MiB
    # (v5e's default scoped limit is only 16 MiB; v7x users should keep tiles small
    # enough that the estimate stays under its 64 MiB physical VMEM).
    return int(min(128 * 1024 * 1024, max(32 * 1024 * 1024, 2 * nbytes)))


def normal_self_attention_1d(x, wq, bq, wk, bk, wv, bv, *,
                             block_m=512, block_q=512, block_k=512,
                             kv_resident_bytes=4 * 1024 * 1024,
                             compute_dtype=jnp.bfloat16):
    """x: (B, D, L). Weights w*: (D, D) stored as (in, out) (= W_torch.T). b*: (D,)."""
    B, D, L = x.shape
    if D % 128 != 0:
        raise ValueError("model dim must be a multiple of 128 (module default is 512)")

    out_dtype = x.dtype
    qkv_dtype = compute_dtype            # bf16 intermediate halves HBM traffic of pass 2
    x_it = np.dtype(x.dtype).itemsize
    cd_it = np.dtype(compute_dtype).itemsize
    qkv_it = np.dtype(qkv_dtype).itemsize
    out_it = np.dtype(out_dtype).itemsize
    approx_recip = jnp.dtype(compute_dtype) != jnp.dtype(jnp.float32)

    # Fuse the three projections into one wide matmul (N = 3D fills the MXU).
    w_qkv = jnp.concatenate([wq, wk, wv], axis=1).astype(compute_dtype)          # (D, 3D)
    b_qkv = jnp.concatenate([bq, bk, bv], axis=0).reshape(1, 3 * D).astype(jnp.float32)

    tm = _split_for_megacore(B, L, _pick_seq_tile(L, block_m))
    tq = _split_for_megacore(B, L, _pick_seq_tile(L, block_q))
    # K/V residency: if one batch's fused K|V fits the budget, keep it resident for
    # the whole batch (ki trip count 1 -> no HBM re-streaming across query tiles).
    if L * 2 * D * qkv_it <= kv_resident_bytes:
        tk = L
    else:
        tk = _pick_seq_tile(L, block_k)

    # ---- 1) fused QKV projection; reads x natively as (B, D, L) -------------------
    vmem_qkv = (2 * D * tm * x_it + 2 * D * 3 * D * cd_it + 2 * 3 * D * 4
                + 2 * tm * D * qkv_it + 2 * tm * 2 * D * qkv_it)
    q_proj, kv_proj = pl.pallas_call(
        functools.partial(_qkv_proj_kernel, dim=D, compute_dtype=compute_dtype),
        out_shape=(jax.ShapeDtypeStruct((B, L, D), qkv_dtype),
                   jax.ShapeDtypeStruct((B, L, 2 * D), qkv_dtype)),
        grid_spec=pltpu.PrefetchScalarGridSpec(
            num_scalar_prefetch=0,
            grid=(B, L // tm),
            in_specs=[
                pl.BlockSpec((1, D, tm), lambda b, m: (b, 0, m)),
                pl.BlockSpec((D, 3 * D), lambda b, m: (0, 0)),   # resident weight
                pl.BlockSpec((1, 3 * D), lambda b, m: (0, 0)),   # resident bias
            ],
            out_specs=[
                pl.BlockSpec((1, tm, D), lambda b, m: (b, m, 0)),
                pl.BlockSpec((1, tm, 2 * D), lambda b, m: (b, m, 0)),
            ],
        ),
        compiler_params=pltpu.CompilerParams(
            dimension_semantics=("parallel", "parallel"),
            vmem_limit_bytes=_vmem_limit(vmem_qkv)),
        cost_estimate=pl.CostEstimate(
            flops=int(2 * B * L * D * 3 * D),
            transcendentals=0,
            bytes_accessed=int(B * D * L * x_it + D * 3 * D * cd_it + 3 * D * 4
                               + B * L * 3 * D * qkv_it)),
    )(x, w_qkv, b_qkv)

    # ---- 2) flash attention; writes the output natively as (B, D, L) --------------
    vmem_attn = (2 * tq * D * qkv_it + 2 * tk * 2 * D * qkv_it + 2 * D * tq * out_it
                 + 4 * tq * D + 2 * 4 * tq * 128)
    out = pl.pallas_call(
        functools.partial(_flash_attn_kernel, dim=D, compute_dtype=compute_dtype,
                          approx_recip=approx_recip),
        out_shape=jax.ShapeDtypeStruct((B, D, L), out_dtype),
        grid_spec=pltpu.PrefetchScalarGridSpec(
            num_scalar_prefetch=0,
            grid=(B, L // tq, L // tk),
            in_specs=[
                pl.BlockSpec((1, tq, D), lambda b, qi, ki: (b, qi, 0)),      # Q
                pl.BlockSpec((1, tk, 2 * D), lambda b, qi, ki: (b, ki, 0)),  # K|V fused
            ],
            out_specs=pl.BlockSpec((1, D, tq), lambda b, qi, ki: (b, 0, qi)),
            scratch_shapes=[
                pltpu.VMEM((tq, 1), jnp.float32),   # running row max
                pltpu.VMEM((tq, 1), jnp.float32),   # running denominator
                pltpu.VMEM((tq, D), jnp.float32),   # output accumulator
            ],
        ),
        compiler_params=pltpu.CompilerParams(
            dimension_semantics=("parallel", "parallel", "arbitrary"),
            vmem_limit_bytes=_vmem_limit(vmem_attn)),
        cost_estimate=pl.CostEstimate(
            flops=int(4 * B * L * L * D),
            transcendentals=int(B * L * L),
            bytes_accessed=int(B * L * D * qkv_it                       # Q read once
                               + (L // tq) * B * L * 2 * D * qkv_it     # K/V re-read
                               + B * D * L * out_it)),                  # output write
    )(q_proj, kv_proj)

    return out


# ----------------------------------- reference ------------------------------------

def _reference(x, wq, bq, wk, bk, wv, bv):
    hp = lax.Precision.HIGHEST
    xt = jnp.transpose(x, (0, 2, 1))
    q = jnp.einsum("bld,de->ble", xt, wq, precision=hp) + bq
    k = jnp.einsum("bld,de->ble", xt, wk, precision=hp) + bk
    v = jnp.einsum("bld,de->ble", xt, wv, precision=hp) + bv
    attn = jax.nn.softmax(jnp.einsum("bld,bmd->blm", q, k, precision=hp), axis=-1)
    r = jnp.einsum("blm,bmd->bld", attn, v, precision=hp)
    return jnp.transpose(r, (0, 2, 1))


if __name__ == "__main__":
    # Small TPU-tile-friendly shapes; module default dim=512. L=256 with 128 tiles
    # exercises multiple query tiles AND multiple K/V (online-softmax) steps.
    B, D, L = 2, 128, 256

    key = jax.random.PRNGKey(0)
    kx, kq, kbq, kk, kbk, kv, kbv = jax.random.split(key, 7)

    scale = 1.0 / jnp.sqrt(jnp.float32(D))
    x  = jax.random.normal(kx,  (B, D, L), dtype=jnp.float32)
    wq = jax.random.normal(kq,  (D, D), dtype=jnp.float32) * scale
    bq = jax.random.normal(kbq, (D,),   dtype=jnp.float32) * scale
    wk = jax.random.normal(kk,  (D, D), dtype=jnp.float32) * scale
    bk = jax.random.normal(kbk, (D,),   dtype=jnp.float32) * scale
    wv = jax.random.normal(kv,  (D, D), dtype=jnp.float32) * scale
    bv = jax.random.normal(kbv, (D,),   dtype=jnp.float32) * scale

    # f32 verification path: small tiles, no K/V residency -> exercises multiple
    # ki steps of the online softmax; checked against the high-precision reference.
    attn_f32 = jax.jit(functools.partial(
        normal_self_attention_1d, block_m=128, block_q=128, block_k=128,
        kv_resident_bytes=0, compute_dtype=jnp.float32))
    out = jax.block_until_ready(attn_f32(x, wq, bq, wk, bk, wv, bv))

    ref = _reference(x, wq, bq, wk, bk, wv, bv)
    assert out.shape == (B, D, L)
    assert jnp.allclose(out, ref, atol=2e-3, rtol=2e-3), "mismatch vs. JAX reference"

    # Default perf config (bf16 MXU operands + bf16 qkv intermediate + resident K/V):
    # smoke test for compile/run; numerics intentionally differ from f32 reference.
    attn_perf = jax.jit(normal_self_attention_1d)
    out_perf = jax.block_until_ready(attn_perf(x, wq, bq, wk, bk, wv, bv))
    assert out_perf.shape == (B, D, L)
    assert bool(jnp.isfinite(out_perf).all())
    # bf16 path should still be close to the reference (operand-rounding error only).
    assert bool(jnp.mean(jnp.abs(out_perf - ref)) < 0.1)

    print("KERNEL_OK")
</pallas_src>

<mosaic_0001>
module attributes {stable_mosaic.version = 11 : i64} {
  func.func @_qkv_proj_kernel(%arg0: i32, %arg1: i32, %arg2: memref<1x128x128xf32, #tpu.memory_space<vmem>>, %arg3: memref<128x384xf32, #tpu.memory_space<vmem>>, %arg4: memref<1x384xf32, #tpu.memory_space<vmem>>, %arg5: memref<1x128x128xf32, #tpu.memory_space<vmem>>, %arg6: memref<1x128x256xf32, #tpu.memory_space<vmem>>) attributes {dimension_semantics = [#tpu.dimension_semantics<parallel>, #tpu.dimension_semantics<parallel>], iteration_bounds = array<i64: 2, 2>, scalar_prefetch = 0 : i64, scratch_operands = 0 : i64, tpu.core_type = #tpu.core_type<tc>, window_params = [{transform_indices = @transform_0, window_bounds = array<i64: 1, 128, 128>}, {pipeline_mode = #tpu.pipeline_mode<synchronous>, transform_indices = @transform_1, window_bounds = array<i64: 128, 384>}, {pipeline_mode = #tpu.pipeline_mode<synchronous>, transform_indices = @transform_2, window_bounds = array<i64: 1, 384>}, {transform_indices = @transform_3, window_bounds = array<i64: 1, 128, 128>}, {transform_indices = @transform_4, window_bounds = array<i64: 1, 128, 256>}]} {
    %c0 = arith.constant 0 : index
    %c0_0 = arith.constant 0 : index
    %c0_1 = arith.constant 0 : index
    %0 = vector.load %arg2[%c0, %c0_0, %c0_1] : memref<1x128x128xf32, #tpu.memory_space<vmem>>, vector<1x128x128xf32>
    %1 = vector.shape_cast %0 : vector<1x128x128xf32> to vector<128x128xf32>
    %c0_2 = arith.constant 0 : index
    %c0_3 = arith.constant 0 : index
    %2 = vector.load %arg3[%c0_2, %c0_3] : memref<128x384xf32, #tpu.memory_space<vmem>>, vector<128x384xf32>
    %cst = arith.constant dense<0.000000e+00> : vector<128x384xf32>
    %3 = tpu.matmul %1, %2, %cst {dimension_numbers = #tpu.dot_dimension_numbers<[0], [0], [1], [1], [0, 1, 1, 1], [], []>} : vector<128x128xf32>, vector<128x384xf32>, vector<128x384xf32> -> vector<128x384xf32>
    %c0_4 = arith.constant 0 : index
    %c0_5 = arith.constant 0 : index
    %4 = vector.load %arg4[%c0_4, %c0_5] : memref<1x384xf32, #tpu.memory_space<vmem>>, vector<1x384xf32>
    %5 = vector.broadcast %4 : vector<1x384xf32> to vector<128x384xf32>
    %6 = arith.addf %3, %5 : vector<128x384xf32>
    %7 = vector.extract_strided_slice %6 {offsets = [0, 0], sizes = [128, 128], strides = [1, 1]} : vector<128x384xf32> to vector<128x128xf32>
    %c0_6 = arith.constant 0 : index
    %c0_7 = arith.constant 0 : index
    %c0_8 = arith.constant 0 : index
    %8 = vector.load %arg5[%c0_6, %c0_7, %c0_8] : memref<1x128x128xf32, #tpu.memory_space<vmem>>, vector<1x128x128xf32>
    %9 = vector.shape_cast %8 : vector<1x128x128xf32> to vector<128x128xf32>
    %10 = vector.shape_cast %7 : vector<128x128xf32> to vector<1x128x128xf32>
    tpu.vector_store %arg5[%c0_6, %c0_7, %c0_8], %10 {strides = array<i32>} : memref<1x128x128xf32, #tpu.memory_space<vmem>>, vector<1x128x128xf32>,
    %11 = vector.extract_strided_slice %6 {offsets = [0, 128], sizes = [128, 256], strides = [1, 1]} : vector<128x384xf32> to vector<128x256xf32>
    %c0_9 = arith.constant 0 : index
    %c0_10 = arith.constant 0 : index
    %c0_11 = arith.constant 0 : index
    %12 = vector.load %arg6[%c0_9, %c0_10, %c0_11] : memref<1x128x256xf32, #tpu.memory_space<vmem>>, vector<1x128x256xf32>
    %13 = vector.shape_cast %12 : vector<1x128x256xf32> to vector<128x256xf32>
    %14 = vector.shape_cast %11 : vector<128x256xf32> to vector<1x128x256xf32>
    tpu.vector_store %arg6[%c0_9, %c0_10, %c0_11], %14 {strides = array<i32>} : memref<1x128x256xf32, #tpu.memory_space<vmem>>, vector<1x128x256xf32>,
    return
  }
  func.func @transform_0(%arg0: i32, %arg1: i32) -> (i32, i32, i32) {
    %c0_i32 = arith.constant 0 : i32
    %c0_i32_0 = arith.constant 0 : i32
    return %arg0, %c0_i32, %arg1 : i32, i32, i32
  }
  func.func @transform_1(%arg0: i32, %arg1: i32) -> (i32, i32) {
    %c0_i32 = arith.constant 0 : i32
    %c0_i32_0 = arith.constant 0 : i32
    %c0_i32_1 = arith.constant 0 : i32
    return %c0_i32, %c0_i32_0 : i32, i32
  }
  func.func @transform_2(%arg0: i32, %arg1: i32) -> (i32, i32) {
    %c0_i32 = arith.constant 0 : i32
    %c0_i32_0 = arith.constant 0 : i32
    %c0_i32_1 = arith.constant 0 : i32
    return %c0_i32, %c0_i32_0 : i32, i32
  }
  func.func @transform_3(%arg0: i32, %arg1: i32) -> (i32, i32, i32) {
    %c0_i32 = arith.constant 0 : i32
    %c0_i32_0 = arith.constant 0 : i32
    return %arg0, %arg1, %c0_i32 : i32, i32, i32
  }
  func.func @transform_4(%arg0: i32, %arg1: i32) -> (i32, i32, i32) {
    %c0_i32 = arith.constant 0 : i32
    %c0_i32_0 = arith.constant 0 : i32
    return %arg0, %arg1, %c0_i32 : i32, i32, i32
  }
}

module attributes {stable_mosaic.version = 11 : i64} {
  func.func @_flash_attn_kernel(%arg0: i32, %arg1: i32, %arg2: i32, %arg3: memref<1x128x128xf32, #tpu.memory_space<vmem>>, %arg4: memref<1x128x256xf32, #tpu.memory_space<vmem>>, %arg5: memref<1x128x128xf32, #tpu.memory_space<vmem>>, %arg6: memref<128x1xf32, #tpu.memory_space<vmem>>, %arg7: memref<128x1xf32, #tpu.memory_space<vmem>>, %arg8: memref<128x128xf32, #tpu.memory_space<vmem>>) attributes {dimension_semantics = [#tpu.dimension_semantics<parallel>, #tpu.dimension_semantics<parallel>, #tpu.dimension_semantics<arbitrary>], iteration_bounds = array<i64: 2, 2, 2>, scalar_prefetch = 0 : i64, scratch_operands = 3 : i64, tpu.core_type = #tpu.core_type<tc>, window_params = [{transform_indices = @transform_0, window_bounds = array<i64: 1, 128, 128>}, {transform_indices = @transform_1, window_bounds = array<i64: 1, 128, 256>}, {transform_indices = @transform_2, window_bounds = array<i64: 1, 128, 128>}]} {
    %c0_i32 = arith.constant 0 : i32
    %0 = arith.cmpi eq, %arg2, %c0_i32 : i32
    %1 = arith.extui %0 : i1 to i32
    %c0_i32_0 = arith.constant 0 : i32
    %2 = arith.cmpi ne, %1, %c0_i32_0 : i32
    scf.if %2 {
      %cst_22 = arith.constant 0xFF800000 : f32
      %35 = vector.broadcast %cst_22 : f32 to vector<128x1xf32>
      %c0_23 = arith.constant 0 : index
      %c0_24 = arith.constant 0 : index
      %36 = vector.load %arg6[%c0_23, %c0_24] : memref<128x1xf32, #tpu.memory_space<vmem>>, vector<128x1xf32>
      tpu.vector_store %arg6[%c0_23, %c0_24], %35 {strides = array<i32>} : memref<128x1xf32, #tpu.memory_space<vmem>>, vector<128x1xf32>,
      %cst_25 = arith.constant 0.000000e+00 : f32
      %37 = vector.broadcast %cst_25 : f32 to vector<128x1xf32>
      %c0_26 = arith.constant 0 : index
      %c0_27 = arith.constant 0 : index
      %38 = vector.load %arg7[%c0_26, %c0_27] : memref<128x1xf32, #tpu.memory_space<vmem>>, vector<128x1xf32>
      tpu.vector_store %arg7[%c0_26, %c0_27], %37 {strides = array<i32>} : memref<128x1xf32, #tpu.memory_space<vmem>>, vector<128x1xf32>,
      %cst_28 = arith.constant 0.000000e+00 : f32
      %39 = vector.broadcast %cst_28 : f32 to vector<128x128xf32>
      %c0_29 = arith.constant 0 : index
      %c0_30 = arith.constant 0 : index
      %40 = vector.load %arg8[%c0_29, %c0_30] : memref<128x128xf32, #tpu.memory_space<vmem>>, vector<128x128xf32>
      tpu.vector_store %arg8[%c0_29, %c0_30], %39 {strides = array<i32>} : memref<128x128xf32, #tpu.memory_space<vmem>>, vector<128x128xf32>,
    } else {
    }
    %c0 = arith.constant 0 : index
    %c0_1 = arith.constant 0 : index
    %c0_2 = arith.constant 0 : index
    %3 = vector.load %arg3[%c0, %c0_1, %c0_2] : memref<1x128x128xf32, #tpu.memory_space<vmem>>, vector<1x128x128xf32>
    %4 = vector.shape_cast %3 : vector<1x128x128xf32> to vector<128x128xf32>
    %c0_3 = arith.constant 0 : index
    %c0_4 = arith.constant 0 : index
    %c0_5 = arith.constant 0 : index
    %5 = vector.load %arg4[%c0_3, %c0_4, %c0_5] : memref<1x128x256xf32, #tpu.memory_space<vmem>>, vector<1x128x256xf32>
    %6 = vector.shape_cast %5 : vector<1x128x256xf32> to vector<128x256xf32>
    %7 = vector.extract_strided_slice %6 {offsets = [0, 0], sizes = [128, 128], strides = [1, 1]} : vector<128x256xf32> to vector<128x128xf32>
    %8 = vector.extract_strided_slice %6 {offsets = [0, 128], sizes = [128, 128], strides = [1, 1]} : vector<128x256xf32> to vector<128x128xf32>
    %cst = arith.constant dense<0.000000e+00> : vector<128x128xf32>
    %9 = tpu.matmul %4, %7, %cst {dimension_numbers = #tpu.dot_dimension_numbers<[1], [1], [0], [0], [0, 0, 1, 0], [], []>} : vector<128x128xf32>, vector<128x128xf32>, vector<128x128xf32> -> vector<128x128xf32>
    %c0_6 = arith.constant 0 : index
    %c0_7 = arith.constant 0 : index
    %10 = vector.load %arg6[%c0_6, %c0_7] : memref<128x1xf32, #tpu.memory_space<vmem>>, vector<128x1xf32>
    %cst_8 = arith.constant dense<0xFF800000> : vector<128xf32>
    %11 = vector.multi_reduction <maximumf>, %9, %cst_8 [1] : vector<128x128xf32> to vector<128xf32>
    %12 = vector.shape_cast %11 : vector<128xf32> to vector<128x1xf32>
    %13 = arith.maximumf %10, %12 : vector<128x1xf32>
    %14 = arith.subf %10, %13 : vector<128x1xf32>
    %15 = math.exp %14 : vector<128x1xf32>
    %16 = vector.broadcast %13 : vector<128x1xf32> to vector<128x128xf32>
    %17 = arith.subf %9, %16 : vector<128x128xf32>
    %18 = math.exp %17 : vector<128x128xf32>
    %c0_9 = arith.constant 0 : index
    %c0_10 = arith.constant 0 : index
    %19 = vector.load %arg7[%c0_9, %c0_10] : memref<128x1xf32, #tpu.memory_space<vmem>>, vector<128x1xf32>
    %20 = arith.mulf %15, %19 : vector<128x1xf32>
    %cst_11 = arith.constant dense<0.000000e+00> : vector<128xf32>
    %21 = vector.multi_reduction <add>, %18, %cst_11 [1] : vector<128x128xf32> to vector<128xf32>
    %22 = vector.shape_cast %21 : vector<128xf32> to vector<128x1xf32>
    %23 = arith.addf %20, %22 : vector<128x1xf32>
    %c0_12 = arith.constant 0 : index
    %c0_13 = arith.constant 0 : index
    %24 = vector.load %arg7[%c0_12, %c0_13] : memref<128x1xf32, #tpu.memory_space<vmem>>, vector<128x1xf32>
    tpu.vector_store %arg7[%c0_12, %c0_13], %23 {strides = array<i32>} : memref<128x1xf32, #tpu.memory_space<vmem>>, vector<128x1xf32>,
    %cst_14 = arith.constant dense<0.000000e+00> : vector<128x128xf32>
    %25 = tpu.matmul %18, %8, %cst_14 {dimension_numbers = #tpu.dot_dimension_numbers<[1], [0], [0], [1], [0, 0, 1, 1], [], []>} : vector<128x128xf32>, vector<128x128xf32>, vector<128x128xf32> -> vector<128x128xf32>
    %c0_15 = arith.constant 0 : index
    %c0_16 = arith.constant 0 : index
    %26 = vector.load %arg8[%c0_15, %c0_16] : memref<128x128xf32, #tpu.memory_space<vmem>>, vector<128x128xf32>
    %27 = vector.broadcast %15 : vector<128x1xf32> to vector<128x128xf32>
    %28 = arith.mulf %27, %26 : vector<128x128xf32>
    %29 = arith.addf %28, %25 : vector<128x128xf32>
    %c0_17 = arith.constant 0 : index
    %c0_18 = arith.constant 0 : index
    %30 = vector.load %arg8[%c0_17, %c0_18] : memref<128x128xf32, #tpu.memory_space<vmem>>, vector<128x128xf32>
    tpu.vector_store %arg8[%c0_17, %c0_18], %29 {strides = array<i32>} : memref<128x128xf32, #tpu.memory_space<vmem>>, vector<128x128xf32>,
    %c0_19 = arith.constant 0 : index
    %c0_20 = arith.constant 0 : index
    %31 = vector.load %arg6[%c0_19, %c0_20] : memref<128x1xf32, #tpu.memory_space<vmem>>, vector<128x1xf32>
    tpu.vector_store %arg6[%c0_19, %c0_20], %13 {strides = array<i32>} : memref<128x1xf32, #tpu.memory_space<vmem>>, vector<128x1xf32>,
    %c1_i32 = arith.constant 1 : i32
    %32 = arith.cmpi eq, %arg2, %c1_i32 : i32
    %33 = arith.extui %32 : i1 to i32
    %c0_i32_21 = arith.constant 0 : i32
    %34 = arith.cmpi ne, %33, %c0_i32_21 : i32
    scf.if %34 {
      %c0_22 = arith.constant 0 : index
      %c0_23 = arith.constant 0 : index
      %35 = vector.load %arg7[%c0_22, %c0_23] : memref<128x1xf32, #tpu.memory_space<vmem>>, vector<128x1xf32>
      %36 = tpu.reciprocal %35 : vector<128x1xf32> -> vector<128x1xf32>
      %c0_24 = arith.constant 0 : index
      %c0_25 = arith.constant 0 : index
      %37 = vector.load %arg8[%c0_24, %c0_25] : memref<128x128xf32, #tpu.memory_space<vmem>>, vector<128x128xf32>
      %38 = vector.broadcast %36 : vector<128x1xf32> to vector<128x128xf32>
      %39 = arith.mulf %37, %38 : vector<128x128xf32>
      %40 = tpu.transpose %39, [1, 0] : vector<128x128xf32> -> vector<128x128xf32>
      %c0_26 = arith.constant 0 : index
      %c0_27 = arith.constant 0 : index
      %c0_28 = arith.constant 0 : index
      %41 = vector.load %arg5[%c0_26, %c0_27, %c0_28] : memref<1x128x128xf32, #tpu.memory_space<vmem>>, vector<1x128x128xf32>
      %42 = vector.shape_cast %41 : vector<1x128x128xf32> to vector<128x128xf32>
      %43 = vector.shape_cast %40 : vector<128x128xf32> to vector<1x128x128xf32>
      tpu.vector_store %arg5[%c0_26, %c0_27, %c0_28], %43 {strides = array<i32>} : memref<1x128x128xf32, #tpu.memory_space<vmem>>, vector<1x128x128xf32>,
    } else {
    }
    return
  }
  func.func @transform_0(%arg0: i32, %arg1: i32, %arg2: i32) -> (i32, i32, i32) {
    %c0_i32 = arith.constant 0 : i32
    %c0_i32_0 = arith.constant 0 : i32
    return %arg0, %arg1, %c0_i32 : i32, i32, i32
  }
  func.func @transform_1(%arg0: i32, %arg1: i32, %arg2: i32) -> (i32, i32, i32) {
    %c0_i32 = arith.constant 0 : i32
    %c0_i32_0 = arith.constant 0 : i32
    return %arg0, %arg2, %c0_i32 : i32, i32, i32
  }
  func.func @transform_2(%arg0: i32, %arg1: i32, %arg2: i32) -> (i32, i32, i32) {
    %c0_i32 = arith.constant 0 : i32
    %c0_i32_0 = arith.constant 0 : i32
    return %arg0, %c0_i32, %arg1 : i32, i32, i32
  }
}

</mosaic_0001>

<llo_original>
// kernel: normal_self_attention_1d.2
$region0: #{normal_self_attention_1d.2}
  #allocation0 [shape = 'u32[]', space=smem, size = 0x4, offset = 0x4, fixed_abs, tag = 'smem constant byte address 0x4 - core index']
  #allocation1 [shape = 'u32[144,128]{1,0:T(1,128)}', space=vmem, size = 0x12000, scoped, tag = 'internal scratch']
  %s0 = inlined_call_operand.vmem [shape: f32[2,128,256], index: 0, kind: input, shape index: {}]
  %s1 = inlined_call_operand.vmem [shape: f32[128,384], index: 1, kind: input, shape index: {}]
  %s2 = inlined_call_operand.vmem [shape: f32[1,384], index: 2, kind: input, shape index: {}]
  %s3 = inlined_call_operand.vmem [shape: f32[2,256,128], index: 3, kind: output, shape index: {0}]
  %s4 = inlined_call_operand.vmem [shape: f32[2,256,256], index: 4, kind: output, shape index: {1}]
  %5 = xla_tuple %s3, %s4
  %s6 = sld [smem:[#allocation0]]
  $region91: #{normal_self_attention_1d.2} parent=0
    _
  %s8 = ssub.s32 1, %s6
  %s9 = scalar_select 0, %s8, %s6
  $region1: #{normal_self_attention_1d.2} parent=0
    #allocation2 [shape = 'u8[131072]{0}', space=vmem, size = 0x20000, scoped, tag = 'input window, operand 0']
    loop: start=0, step=1, limit=6
    $region2: #{normal_self_attention_1d.2} parent=1 // loop_pre_header
      _
    $region3: #{normal_self_attention_1d.2} parent=1 // loop_header
      %s11 = sphi 0, %s15
      %p12 = scmp.ge.s32.totalorder %s11, 6
      %s18 = sphi 0, %s30
      %s19 = sphi 0, %s26
      %s20 = sphi 0, %s18
      %s21 = sphi 0, %s19
      %s22 = sphi 0, %s20
      %s23 = sphi 0, %s21
      %s35 = sphi 0, %s37
      %s38 = sphi 0, %s35
      %s39 = sphi 0, %s38
      %s55 = sphi 0, %s39
      %s59 = sphi 0, %s59
      %s61 = sphi 0, %s59
      %s62 = sphi 0, %s61
      %s76 = sphi 0, %s62
      %s80 = sphi 0, %s80
      %s82 = sphi 0, %s80
      %s83 = sphi 0, %s82
      %s97 = sphi 0, %s83
      %s105 = sphi 0, %s107
      %s108 = sphi 0, %s105
      %s109 = sphi 0, %s108
      %s125 = sphi 0, %s109
      %s133 = sphi 0, %s135
      %s136 = sphi 0, %s133
      %s137 = sphi 0, %s136
      %s153 = sphi 0, %s137
    $region4: #{normal_self_attention_1d.2} parent=1 // loop_header_branch
      %14 = sbr.rel (%p12) target = $region8
    $region5: #{normal_self_attention_1d.2} parent=1 // loop_body
      %s16 = ssub.s32 %s11, 1
      %s17 = ssub.s32 %s11, 2
      %s24 = sadd.s32 1, %s19
      %p25 = scmp.ge.s32.totalorder %s24, 2
      %s26 = scalar_select %p25, 0, %s24
      %s27 = sadd.s32 1, %s18
      %s28 = scalar_select %p25, %s27, %s18
      %p29 = scmp.ge.s32.totalorder %s28, 2
      %s30 = scalar_select %p29, 0, %s28
      %s31 = ssub.s32 %s18, %s30
      %s32 = ssub.s32 %s19, %s26
      %s33 = sor.u32 %s31, %s32
      %p34 = scmp.eq.s32.totalorder %s33, 0
      %s36 = sadd.s32 %s35, 1
      %s37 = scalar_select %p34, %s35, %s36
      %p40 = pneg %p34
      %p41 = scmp.eq.s32.totalorder %s11, 3
      %p42 = por %p40, %p41
      %p43 = scmp.ne.s32.totalorder %s35, %s38
      %p44 = scmp.eq.s32.totalorder %s11, 0
      %p45 = por %p43, %p44
      %p46 = scmp.ne.s32.totalorder %s35, %s38
      %p47 = scmp.eq.s32.totalorder %s16, 3
      %p48 = por %p46, %p47
      %p49 = scmp.ne.s32.totalorder %s38, %s39
      %p50 = scmp.eq.s32.totalorder %s16, 0
      %p51 = por %p49, %p50
      %p52 = scmp.ne.s32.totalorder %s38, %s39
      %p53 = scmp.eq.s32.totalorder %s17, 3
      %p54 = por %p52, %p53
      %p56 = scmp.ne.s32.totalorder %s39, %s55
      %p57 = scmp.eq.s32.totalorder %s17, 0
      %p58 = por %p56, %p57
      %s60 = sadd.s32 %s59, 1
      %p63 = scmp.eq.s32.totalorder %s11, 3
      %p64 = scmp.ne.s32.totalorder %s59, %s61
      %p65 = scmp.eq.s32.totalorder %s11, 0
      %p66 = por %p64, %p65
      %p67 = scmp.ne.s32.totalorder %s59, %s61
      %p68 = scmp.eq.s32.totalorder %s16, 3
      %p69 = por %p67, %p68
      %p70 = scmp.ne.s32.totalorder %s61, %s62
      %p71 = scmp.eq.s32.totalorder %s16, 0
      %p72 = por %p70, %p71
      %p73 = scmp.ne.s32.totalorder %s61, %s62
      %p74 = scmp.eq.s32.totalorder %s17, 3
      %p75 = por %p73, %p74
      %p77 = scmp.ne.s32.totalorder %s62, %s76
      %p78 = scmp.eq.s32.totalorder %s17, 0
      %p79 = por %p77, %p78
      %s81 = sadd.s32 %s80, 1
      %p84 = scmp.eq.s32.totalorder %s11, 3
      %p85 = scmp.ne.s32.totalorder %s80, %s82
      %p86 = scmp.eq.s32.totalorder %s11, 0
      %p87 = por %p85, %p86
      %p88 = scmp.ne.s32.totalorder %s80, %s82
      %p89 = scmp.eq.s32.totalorder %s16, 3
      %p90 = por %p88, %p89
      %p91 = scmp.ne.s32.totalorder %s82, %s83
      %p92 = scmp.eq.s32.totalorder %s16, 0
      %p93 = por %p91, %p92
      %p94 = scmp.ne.s32.totalorder %s82, %s83
      %p95 = scmp.eq.s32.totalorder %s17, 3
      %p96 = por %p94, %p95
      %p98 = scmp.ne.s32.totalorder %s83, %s97
      %p99 = scmp.eq.s32.totalorder %s17, 0
      %p100 = por %p98, %p99
      %s101 = ssub.s32 %s18, %s30
      %s102 = ssub.s32 %s19, %s26
      %s103 = sor.u32 %s101, %s102
      %p104 = scmp.eq.s32.totalorder %s103, 0
      %s106 = sadd.s32 %s105, 1
      %s107 = scalar_select %p104, %s105, %s106
      %p110 = pneg %p104
      %p111 = scmp.eq.s32.totalorder %s11, 3
      %p112 = por %p110, %p111
      %p113 = scmp.ne.s32.totalorder %s105, %s108
      %p114 = scmp.eq.s32.totalorder %s11, 0
      %p115 = por %p113, %p114
      %p116 = scmp.ne.s32.totalorder %s105, %s108
      %p117 = scmp.eq.s32.totalorder %s16, 3
      %p118 = por %p116, %p117
      %p119 = scmp.ne.s32.totalorder %s108, %s109
      %p120 = scmp.eq.s32.totalorder %s16, 0
      %p121 = por %p119, %p120
      %p122 = scmp.ne.s32.totalorder %s108, %s109
      %p123 = scmp.eq.s32.totalorder %s17, 3
      %p124 = por %p122, %p123
      %p126 = scmp.ne.s32.totalorder %s109, %s125
      %p127 = scmp.eq.s32.totalorder %s17, 0
      %p128 = por %p126, %p127
      %s129 = ssub.s32 %s18, %s30
      %s130 = ssub.s32 %s19, %s26
      %s131 = sor.u32 %s129, %s130
      %p132 = scmp.eq.s32.totalorder %s131, 0
      %s134 = sadd.s32 %s133, 1
      %s135 = scalar_select %p132, %s133, %s134
      %p138 = pneg %p132
      %p139 = scmp.eq.s32.totalorder %s11, 3
      %p140 = por %p138, %p139
      %p141 = scmp.ne.s32.totalorder %s133, %s136
      %p142 = scmp.eq.s32.totalorder %s11, 0
      %p143 = por %p141, %p142
      %p144 = scmp.ne.s32.totalorder %s133, %s136
      %p145 = scmp.eq.s32.totalorder %s16, 3
      %p146 = por %p144, %p145
      %p147 = scmp.ne.s32.totalorder %s136, %s137
      %p148 = scmp.eq.s32.totalorder %s16, 0
      %p149 = por %p147, %p148
      %p150 = scmp.ne.s32.totalorder %s136, %s137
      %p151 = scmp.eq.s32.totalorder %s17, 3
      %p152 = por %p150, %p151
      %p154 = scmp.ne.s32.totalorder %s137, %s153
      %p155 = scmp.eq.s32.totalorder %s17, 0
      %p156 = por %p154, %p155
      %p157 = scmp.le.s32.totalorder 1, %s11
      %p158 = scmp.lt.s32.totalorder %s11, 5
      %p159 = pnand %p157, %p158
      %p160 = pneg %p159
      // Predicated region
      $region9: #{normal_self_attention_1d.2} parent=5 // pred_check
        _
      $region10: #{normal_self_attention_1d.2} parent=5 // pred_check_branch
        %162 = sbr.rel (%p159) target = $region12
      $region11: #{normal_self_attention_1d.2} parent=5 // pred_region
        %s163 = ssub.s32 %s11, 1
        // Predicated region
        $region13: #{normal_self_attention_1d.2} parent=11 // pred_check
          %p164 = pneg %p72
        $region14: #{normal_self_attention_1d.2} parent=11 // pred_check_branch
          %166 = sbr.rel (%p164) target = $region16
        $region15: #{normal_self_attention_1d.2} parent=11 // pred_region
          _
        $region16: #{normal_self_attention_1d.2} parent=11 // pred_fallthru
          _
        // Predicated region
        $region17: #{normal_self_attention_1d.2} parent=11 // pred_check
          %p167 = pneg %p93
        $region18: #{normal_self_attention_1d.2} parent=11 // pred_check_branch
          %169 = sbr.rel (%p167) target = $region20
        $region19: #{normal_self_attention_1d.2} parent=11 // pred_region
          _
        $region20: #{normal_self_attention_1d.2} parent=11 // pred_fallthru
          _
      $region12: #{normal_self_attention_1d.2} parent=5 // pred_fallthru
        _
      %p170 = scmp.lt.s32.totalorder %s11, 4
      // Predicated region
      $region21: #{normal_self_attention_1d.2} parent=5 // pred_check
        %p171 = pneg %p170
      $region22: #{normal_self_attention_1d.2} parent=5 // pred_check_branch
        %173 = sbr.rel (%p171) target = $region24
      $region23: #{normal_self_attention_1d.2} parent=5 // pred_region
        // Predicated region
        $region25: #{normal_self_attention_1d.2} parent=23 // pred_check
          %p174 = pneg %p45
        $region26: #{normal_self_attention_1d.2} parent=23 // pred_check_branch
          %176 = sbr.rel (%p174) target = $region28
        $region27: #{normal_self_attention_1d.2} parent=23 // pred_region
          %s177 = sand.u32 %s35, 1
          %s178 = sand.u32 %s35, 1
          %s179 = smul.addr %s178, 128
          %s180 = scalar_lea.vmem [#allocation2], %s179
          %s181 = smul.addr %s18, 32
          %s182 = sadd.s32 %s19, %s181
          %s183 = smul.addr %s182, 8
          %s184 = scalar_lea.vmem %s0, %s183
          // Predicated region
          $region29: #{normal_self_attention_1d.2} parent=27 // pred_check
            _
          $region30: #{normal_self_attention_1d.2} parent=27 // pred_check_branch
            %186 = sbr.rel (0) target = $region32
          $region31: #{normal_self_attention_1d.2} parent=27 // pred_region
            // Predicated region
            $region33: #{normal_self_attention_1d.2} parent=31 // pred_check
              _
            $region34: #{normal_self_attention_1d.2} parent=31 // pred_check_branch
              %188 = sbr.rel (0) target = $region36
            $region35: #{normal_self_attention_1d.2} parent=31 // pred_region
              // Predicated region
              $region48: #{normal_self_attention_1d.2} parent=35 // pred_check
                _
              $region49: #{normal_self_attention_1d.2} parent=35 // pred_check_branch
                %233 = sbr.rel (0) target = $region51
              $region50: #{normal_self_attention_1d.2} parent=35 // pred_region
                loop: start=0, step=1, limit=1
                $region52: #{normal_self_attention_1d.2} parent=50 // loop_pre_header
                  _
                $region53: #{normal_self_attention_1d.2} parent=50 // loop_header
                  %s235 = sphi 0, %s239
                  %p236 = scmp.ge.s32.totalorder %s235, 1
                  %s240 = sphi %s184, %s184
                  %s241 = sphi %s180, %s180
                $region54: #{normal_self_attention_1d.2} parent=50 // loop_header_branch
                  %238 = sbr.rel (%p236) target = $region58
                $region55: #{normal_self_attention_1d.2} parent=50 // loop_body
                  %v242 = vld [vmem:[%s240] sm:$0xff]
                  %243 = vst [vmem:[%s241] sm:$0xff] %v242
                  %v244 = vld [vmem:[%s240 + $0x10] sm:$0xff]
                  %245 = vst [vmem:[%s241 + $0x8] sm:$0xff] %v244
                  %v246 = vld [vmem:[%s240 + $0x20] sm:$0xff]
                  %247 = vst [vmem:[%s241 + $0x10] sm:$0xff] %v246
                  %v248 = vld [vmem:[%s240 + $0x30] sm:$0xff]
                  %249 = vst [vmem:[%s241 + $0x18] sm:$0xff] %v248
                  %v250 = vld [vmem:[%s240 + $0x40] sm:$0xff]
                  %251 = vst [vmem:[%s241 + $0x20] sm:$0xff] %v250
                  %v252 = vld [vmem:[%s240 + $0x50] sm:$0xff]
                  %253 = vst [vmem:[%s241 + $0x28] sm:$0xff] %v252
                  %v254 = vld [vmem:[%s240 + $0x60] sm:$0xff]
                  %255 = vst [vmem:[%s241 + $0x30] sm:$0xff] %v254
                  %v256 = vld [vmem:[%s240 + $0x70] sm:$0xff]
                  %257 = vst [vmem:[%s241 + $0x38] sm:$0xff] %v256
                  %v258 = vld [vmem:[%s240 + $0x80] sm:$0xff]
                  %259 = vst [vmem:[%s241 + $0x40] sm:$0xff] %v258
                  %v260 = vld [vmem:[%s240 + $0x90] sm:$0xff]
                  %261 = vst [vmem:[%s241 + $0x48] sm:$0xff] %v260
                  %v262 = vld [vmem:[%s240 + $0xa0] sm:$0xff]
                  %263 = vst [vmem:[%s241 + $0x50] sm:$0xff] %v262
                  %v264 = vld [vmem:[%s240 + $0xb0] sm:$0xff]
                  %265 = vst [vmem:[%s241 + $0x58] sm:$0xff] %v264
                  %v266 = vld [vmem:[%s240 + $0xc0] sm:$0xff]
                  %267 = vst [vmem:[%s241 + $0x60] sm:$0xff] %v266
                  %v268 = vld [vmem:[%s240 + $0xd0] sm:$0xff]
                  %269 = vst [vmem:[%s241 + $0x68] sm:$0xff] %v268
                  %v270 = vld [vmem:[%s240 + $0xe0] sm:$0xff]
                  %271 = vst [vmem:[%s241 + $0x70] sm:$0xff] %v270
                  %v272 = vld [vmem:[%s240 + $0xf0] sm:$0xff]
                  %273 = vst [vmem:[%s241 + $0x78] sm:$0xff] %v272
                $region56: #{normal_self_attention_1d.2} parent=50 // loop_footer
                  %s239 = sadd.s32 1, %s235
                $region57: #{normal_self_attention_1d.2} parent=50 // loop_footer_branch
                  %234 = sbr.rel target = $region53
                $region58: #{normal_self_attention_1d.2} parent=50 // loop_exit
                  _
              $region51: #{normal_self_attention_1d.2} parent=35 // pred_fallthru
                _
              // Predicated region
              $region59: #{normal_self_attention_1d.2} parent=35 // pred_check
                _
              $region60: #{normal_self_attention_1d.2} parent=35 // pred_check_branch
                %275 = sbr.rel target = $region62
              $region61: #{normal_self_attention_1d.2} parent=35 // pred_region
                _
              $region62: #{normal_self_attention_1d.2} parent=35 // pred_fallthru
                _
            $region36: #{normal_self_attention_1d.2} parent=31 // pred_fallthru
              _
            // Predicated region
            $region37: #{normal_self_attention_1d.2} parent=31 // pred_check
              _
            $region38: #{normal_self_attention_1d.2} parent=31 // pred_check_branch
              %190 = sbr.rel target = $region40
            $region39: #{normal_self_attention_1d.2} parent=31 // pred_region
              loop: start=0, step=1, limit=1
              $region41: #{normal_self_attention_1d.2} parent=39 // loop_pre_header
                _
              $region42: #{normal_self_attention_1d.2} parent=39 // loop_header
                %s193 = sphi 0, %s197
                %p194 = scmp.ge.s32.totalorder %s193, 1
                %s198 = sphi %s184, %s184
                %s199 = sphi %s180, %s180
              $region43: #{normal_self_attention_1d.2} parent=39 // loop_header_branch
                %196 = sbr.rel (%p194) target = $region47
              $region44: #{normal_self_attention_1d.2} parent=39 // loop_body
                %v200 = vld [vmem:[%s198] sm:$0xff]
                %201 = vst [vmem:[%s199] sm:$0xff] %v200
                %v202 = vld [vmem:[%s198 + $0x10] sm:$0xff]
                %203 = vst [vmem:[%s199 + $0x8] sm:$0xff] %v202
                %v204 = vld [vmem:[%s198 + $0x20] sm:$0xff]
                %205 = vst [vmem:[%s199 + $0x10] sm:$0xff] %v204
                %v206 = vld [vmem:[%s198 + $0x30] sm:$0xff]
                %207 = vst [vmem:[%s199 + $0x18] sm:$0xff] %v206
                %v208 = vld [vmem:[%s198 + $0x40] sm:$0xff]
                %209 = vst [vmem:[%s199 + $0x20] sm:$0xff] %v208
                %v210 = vld [vmem:[%s198 + $0x50] sm:$0xff]
                %211 = vst [vmem:[%s199 + $0x28] sm:$0xff] %v210
                %v212 = vld [vmem:[%s198 + $0x60] sm:$0xff]
                %213 = vst [vmem:[%s199 + $0x30] sm:$0xff] %v212
                %v214 = vld [vmem:[%s198 + $0x70] sm:$0xff]
                %215 = vst [vmem:[%s199 + $0x38] sm:$0xff] %v214
                %v216 = vld [vmem:[%s198 + $0x80] sm:$0xff]
                %217 = vst [vmem:[%s199 + $0x40] sm:$0xff] %v216
                %v218 = vld [vmem:[%s198 + $0x90] sm:$0xff]
                %219 = vst [vmem:[%s199 + $0x48] sm:$0xff] %v218
                %v220 = vld [vmem:[%s198 + $0xa0] sm:$0xff]
                %221 = vst [vmem:[%s199 + $0x50] sm:$0xff] %v220
                %v222 = vld [vmem:[%s198 + $0xb0] sm:$0xff]
                %223 = vst [vmem:[%s199 + $0x58] sm:$0xff] %v222
                %v224 = vld [vmem:[%s198 + $0xc0] sm:$0xff]
                %225 = vst [vmem:[%s199 + $0x60] sm:$0xff] %v224
                %v226 = vld [vmem:[%s198 + $0xd0] sm:$0xff]
                %227 = vst [vmem:[%s199 + $0x68] sm:$0xff] %v226
                %v228 = vld [vmem:[%s198 + $0xe0] sm:$0xff]
                %229 = vst [vmem:[%s199 + $0x70] sm:$0xff] %v228
                %v230 = vld [vmem:[%s198 + $0xf0] sm:$0xff]
                %231 = vst [vmem:[%s199 + $0x78] sm:$0xff] %v230
              $region45: #{normal_self_attention_1d.2} parent=39 // loop_footer
                %s197 = sadd.s32 1, %s193
              $region46: #{normal_self_attention_1d.2} parent=39 // loop_footer_branch
                %192 = sbr.rel target = $region42
              $region47: #{normal_self_attention_1d.2} parent=39 // loop_exit
                _
            $region40: #{normal_self_attention_1d.2} parent=31 // pred_fallthru
              _
          $region32: #{normal_self_attention_1d.2} parent=27 // pred_fallthru
            _
          %276 = vnop
        $region28: #{normal_self_attention_1d.2} parent=23 // pred_fallthru
          _
      $region24: #{normal_self_attention_1d.2} parent=5 // pred_fallthru
        _
      %p277 = scmp.le.s32.totalorder 1, %s11
      %p278 = scmp.lt.s32.totalorder %s11, 5
      %p279 = pnand %p277, %p278
      %p280 = pneg %p279
      // Predicated region
      $region63: #{normal_self_attention_1d.2} parent=5 // pred_check
        _
      $region64: #{normal_self_attention_1d.2} parent=5 // pred_check_branch
        %282 = sbr.rel (%p279) target = $region66
      $region65: #{normal_self_attention_1d.2} parent=5 // pred_region
        %s283 = ssub.s32 %s11, 1
        %s284 = sand.u32 %s38, 1
        %s285 = sand.u32 %s38, 1
        %s286 = smul.addr %s285, 128
        %s287 = scalar_lea.vmem [#allocation2], %s286
        // Predicated region
        $region67: #{normal_self_attention_1d.2} parent=65 // pred_check
          %p288 = pneg %p51
        $region68: #{normal_self_attention_1d.2} parent=65 // pred_check_branch
          %290 = sbr.rel (%p288) target = $region70
        $region69: #{normal_self_attention_1d.2} parent=65 // pred_region
          _
        $region70: #{normal_self_attention_1d.2} parent=65 // pred_fallthru
          _
        %s291 = sand.u32 %s38, 1
        %s292 = sand.u32 %s38, 1
        %s293 = smul.addr %s292, 128
        %s294 = scalar_lea.vmem [#allocation2], %s293
        %p295 = pneg %p51
        %p296 = pneg %p48
        %p297 = pneg %p72
        %p298 = pneg %p69
        %p299 = pneg %p93
        %p300 = pneg %p90
        %p301 = pneg %p121
        %p302 = pneg %p118
        %s303 = smul.u32 16, %s21
        %p304 = scmp.lt.s32.totalorder %s20, 1
        %s305 = scalar_select %p304, %s20, 1
        %p306 = scmp.lt.s32.totalorder %s303, 31
        %s307 = scalar_select %p306, %s303, 31
        %s308 = smul.addr %s305, 32
        %s309 = sadd.s32 %s307, %s308
        %s310 = smul.addr %s309, 8
        %s311 = scalar_lea.vmem %s3, %s310
        %p312 = pneg %p149
        %p313 = pneg %p146
        %s314 = smul.u32 16, %s21
        %p315 = scmp.lt.s32.totalorder %s20, 1
        %s316 = scalar_select %p315, %s20, 1
        %p317 = scmp.lt.s32.totalorder %s314, 31
        %s318 = scalar_select %p317, %s314, 31
        %s319 = smul.addr %s318, 2
        %s320 = smul.addr %s316, 64
        %s321 = sadd.s32 %s319, %s320
        %s322 = smul.addr %s321, 8
        %s323 = scalar_lea.vmem %s4, %s322
        %s324 = smul.u32 16, %s21
        %p325 = scmp.lt.s32.totalorder %s20, 1
        %s326 = scalar_select %p325, %s20, 1
        %p327 = scmp.lt.s32.totalorder %s324, 31
        %s328 = scalar_select %p327, %s324, 31
        %s329 = smul.addr %s326, 32
        %s330 = sadd.s32 %s328, %s329
        %s331 = smul.addr %s330, 8
        %s332 = scalar_lea.vmem %s3, %s331
        %s333 = smul.u32 16, %s21
        %s334 = smul.u32 16, %s21
        %p335 = scmp.lt.s32.totalorder %s20, 1
        %s336 = scalar_select %p335, %s20, 1
        %p337 = scmp.lt.s32.totalorder %s334, 31
        %s338 = scalar_select %p337, %s334, 31
        %s339 = smul.addr %s338, 2
        %s340 = smul.addr %s336, 64
        %s341 = sadd.s32 %s339, %s340
        %s342 = smul.addr %s341, 8
        %s343 = scalar_lea.vmem %s4, %s342
        %s344 = smul.u32 16, %s21
        %v345 = vld [vmem:[%s287] sm:$0xff]
        %v346 = vld [vmem:[%s287 + $0x8] sm:$0xff]
        %v347 = vld [vmem:[%s287 + $0x10] sm:$0xff]
        %v348 = vld [vmem:[%s287 + $0x18] sm:$0xff]
        %v349 = vld [vmem:[%s287 + $0x20] sm:$0xff]
        %v350 = vld [vmem:[%s287 + $0x28] sm:$0xff]
        %v351 = vld [vmem:[%s287 + $0x30] sm:$0xff]
        %v352 = vld [vmem:[%s287 + $0x38] sm:$0xff]
        %v353 = vld [vmem:[%s287 + $0x40] sm:$0xff]
        %v354 = vld [vmem:[%s287 + $0x48] sm:$0xff]
        %v355 = vld [vmem:[%s287 + $0x50] sm:$0xff]
        %v356 = vld [vmem:[%s287 + $0x58] sm:$0xff]
        %v357 = vld [vmem:[%s287 + $0x60] sm:$0xff]
        %v358 = vld [vmem:[%s287 + $0x68] sm:$0xff]
        %v359 = vld [vmem:[%s287 + $0x70] sm:$0xff]
        %v360 = vld [vmem:[%s287 + $0x78] sm:$0xff]
        %v361 = vld [vmem:[%s1] sm:$0xff]
        %v362 = vld [vmem:[%s1 + $0x8] sm:$0xff]
        %v363 = vld [vmem:[%s1 + $0x10] sm:$0xff]
        %v364 = vld [vmem:[%s1 + $0x18] sm:$0xff]
        %v365 = vld [vmem:[%s1 + $0x20] sm:$0xff]
        %v366 = vld [vmem:[%s1 + $0x28] sm:$0xff]
        %v367 = vld [vmem:[%s1 + $0x30] sm:$0xff]
        %v368 = vld [vmem:[%s1 + $0x38] sm:$0xff]
        %v369 = vld [vmem:[%s1 + $0x40] sm:$0xff]
        %v370 = vld [vmem:[%s1 + $0x48] sm:$0xff]
        %v371 = vld [vmem:[%s1 + $0x50] sm:$0xff]
        %v372 = vld [vmem:[%s1 + $0x58] sm:$0xff]
        %v373 = vld [vmem:[%s1 + $0x60] sm:$0xff]
        %v374 = vld [vmem:[%s1 + $0x68] sm:$0xff]
        %v375 = vld [vmem:[%s1 + $0x70] sm:$0xff]
        %v376 = vld [vmem:[%s1 + $0x78] sm:$0xff]
        %v377 = vld [vmem:[%s1 + $0x80] sm:$0xff]
        %v378 = vld [vmem:[%s1 + $0x88] sm:$0xff]
        %v379 = vld [vmem:[%s1 + $0x90] sm:$0xff]
        %v380 = vld [vmem:[%s1 + $0x98] sm:$0xff]
        %v381 = vld [vmem:[%s1 + $0xa0] sm:$0xff]
        %v382 = vld [vmem:[%s1 + $0xa8] sm:$0xff]
        %v383 = vld [vmem:[%s1 + $0xb0] sm:$0xff]
        %v384 = vld [vmem:[%s1 + $0xb8] sm:$0xff]
        %v385 = vld [vmem:[%s1 + $0xc0] sm:$0xff]
        %v386 = vld [vmem:[%s1 + $0xc8] sm:$0xff]
        %v387 = vld [vmem:[%s1 + $0xd0] sm:$0xff]
        %v388 = vld [vmem:[%s1 + $0xd8] sm:$0xff]
        %v389 = vld [vmem:[%s1 + $0xe0] sm:$0xff]
        %v390 = vld [vmem:[%s1 + $0xe8] sm:$0xff]
        %v391 = vld [vmem:[%s1 + $0xf0] sm:$0xff]
        %v392 = vld [vmem:[%s1 + $0xf8] sm:$0xff]
        %v393 = vld [vmem:[%s1 + $0x100] sm:$0xff]
        %v394 = vld [vmem:[%s1 + $0x108] sm:$0xff]
        %v395 = vld [vmem:[%s1 + $0x110] sm:$0xff]
        %v396 = vld [vmem:[%s1 + $0x118] sm:$0xff]
        %v397 = vld [vmem:[%s1 + $0x120] sm:$0xff]
        %v398 = vld [vmem:[%s1 + $0x128] sm:$0xff]
        %v399 = vld [vmem:[%s1 + $0x130] sm:$0xff]
        %v400 = vld [vmem:[%s1 + $0x138] sm:$0xff]
        %v401 = vld [vmem:[%s1 + $0x140] sm:$0xff]
        %v402 = vld [vmem:[%s1 + $0x148] sm:$0xff]
        %v403 = vld [vmem:[%s1 + $0x150] sm:$0xff]
        %v404 = vld [vmem:[%s1 + $0x158] sm:$0xff]
        %v405 = vld [vmem:[%s1 + $0x160] sm:$0xff]
        %v406 = vld [vmem:[%s1 + $0x168] sm:$0xff]
        %v407 = vld [vmem:[%s1 + $0x170] sm:$0xff]
        %v408 = vld [vmem:[%s1 + $0x178] sm:$0xff]
        %v409 = vld [vmem:[%s2] sm:$0x7]
        %v411 = vlaneseq
        %v412 = vshrl.u32 %v411, 7
        %v413 = vsub.s32 0, %v412
        %v414 = vrot.slane %v409, %v413
        %v415 = vlaneseq
        %v416 = vshrl.u32 %v415, 7
        %v417 = vsub.s32 1, %v416
        %v418 = vrot.slane %v409, %v417
        %v419 = vlaneseq
        %v420 = vshrl.u32 %v419, 7
        %v421 = vsub.s32 2, %v420
        %v422 = vrot.slane %v409, %v421
        %426 = vxpose.xlu0.b32.start [1/16] %v345, 128
        %427 = vxpose.xlu0.b32.cont [2/16] %v346, 128
        %428 = vxpose.xlu0.b32.cont [3/16] %v347, 128
        %429 = vxpose.xlu0.b32.cont [4/16] %v348, 128
        %430 = vxpose.xlu0.b32.cont [5/16] %v349, 128
        %431 = vxpose.xlu0.b32.cont [6/16] %v350, 128
        %432 = vxpose.xlu0.b32.cont [7/16] %v351, 128
        %433 = vxpose.xlu0.b32.cont [8/16] %v352, 128
        %434 = vxpose.xlu0.b32.cont [9/16] %v353, 128
        %435 = vxpose.xlu0.b32.cont [10/16] %v354, 128
        %436 = vxpose.xlu0.b32.cont [11/16] %v355, 128
        %437 = vxpose.xlu0.b32.cont [12/16] %v356, 128
        %438 = vxpose.xlu0.b32.cont [13/16] %v357, 128
        %439 = vxpose.xlu0.b32.cont [14/16] %v358, 128
        %440 = vxpose.xlu0.b32.cont [15/16] %v359, 128
        %441 = vxpose.xlu0.b32.end [16/16] %v360, 128
        %v442 = vpop.trf.xlu0
        %v443 = vpop.trf.xlu0
        %v444 = vpop.trf.xlu0
        %v445 = vpop.trf.xlu0
        %v446 = vpop.trf.xlu0
        %v447 = vpop.trf.xlu0
        %v448 = vpop.trf.xlu0
        %v449 = vpop.trf.xlu0
        %v450 = vpop.trf.xlu0
        %v451 = vpop.trf.xlu0
        %v452 = vpop.trf.xlu0
        %v453 = vpop.trf.xlu0
        %v454 = vpop.trf.xlu0
        %v455 = vpop.trf.xlu0
        %v456 = vpop.trf.xlu0
        %v457 = vpop.trf.xlu0
        %458 = vmatprep.subr.mxu0 %v362
        %459 = vmatpush1.msra.mxu0 %v361
        %460 = vmatprep.subr.mxu0 %v365
        %461 = vmatpush1.msra.mxu0 %v364
        %462 = vmatprep.subr.mxu0 %v368
        %463 = vmatpush1.msra.mxu0 %v367
        %464 = vmatprep.subr.mxu0 %v371
        %465 = vmatpush1.msra.mxu0 %v370
        %466 = vmatprep.subr.mxu0 %v374
        %467 = vmatpush1.msra.mxu0 %v373
        %468 = vmatprep.subr.mxu0 %v377
        %469 = vmatpush1.msra.mxu0 %v376
        %470 = vmatprep.subr.mxu0 %v380
        %471 = vmatpush1.msra.mxu0 %v379
        %472 = vmatprep.subr.mxu0 %v383
        %473 = vmatpush1.msra.mxu0 %v382
        %474 = vmatprep.subr.mxu0 %v386
        %475 = vmatpush1.msra.mxu0 %v385
        %476 = vmatprep.subr.mxu0 %v389
        %477 = vmatpush1.msra.mxu0 %v388
        %478 = vmatprep.subr.mxu0 %v392
        %479 = vmatpush1.msra.mxu0 %v391
        %480 = vmatprep.subr.mxu0 %v395
        %481 = vmatpush1.msra.mxu0 %v394
        %482 = vmatprep.subr.mxu0 %v398
        %483 = vmatpush1.msra.mxu0 %v397
        %484 = vmatprep.subr.mxu0 %v401
        %485 = vmatpush1.msra.mxu0 %v400
        %486 = vmatprep.subr.mxu0 %v404
        %487 = vmatpush1.msra.mxu0 %v403
        %488 = vmatprep.subr.mxu0 %v407
        %489 = vmatpush1.msra.mxu0 %v406
        %490 = vmatprep.subr.mxu0 0.0
        %491 = vmatpush1.msra.mxu0 0.0
        %492 = vmatprep.subr.mxu0 0.0
        %493 = vmatpush1.msra.mxu0 0.0
        %494 = vmatprep.subr.mxu0 0.0
        %495 = vmatpush1.msra.mxu0 0.0
        %496 = vmatprep.subr.mxu0 0.0
        %497 = vmatpush1.msra.mxu0 0.0
        %498 = vmatprep.subr.mxu0 0.0
        %499 = vmatpush1.msra.mxu0 0.0
        %500 = vmatprep.subr.mxu0 0.0
        %501 = vmatpush1.msra.mxu0 0.0
        %502 = vmatprep.subr.mxu0 0.0
        %503 = vmatpush1.msra.mxu0 0.0
        %504 = vmatprep.subr.mxu0 0.0
        %505 = vmatpush1.msra.mxu0 0.0
        %506 = vmatprep.subr.mxu0 0.0
        %507 = vmatpush1.msra.mxu0 0.0
        %508 = vmatprep.subr.mxu0 0.0
        %509 = vmatpush1.msra.mxu0 0.0
        %510 = vmatprep.subr.mxu0 0.0
        %511 = vmatpush1.msra.mxu0 0.0
        %512 = vmatprep.subr.mxu0 0.0
        %513 = vmatpush1.msra.mxu0 0.0
        %514 = vmatprep.subr.mxu0 0.0
        %515 = vmatpush1.msra.mxu0 0.0
        %516 = vmatprep.subr.mxu0 0.0
        %517 = vmatpush1.msra.mxu0 0.0
        %518 = vmatprep.subr.mxu0 0.0
        %519 = vmatpush1.msra.mxu0 0.0
        %520 = vmatprep.subr.mxu0 0.0
        %521 = vmatpush1.msra.mxu0 0.0
        %522 = vmatprep.mubr.f32.mxu0 0.0
        %523 = vmatmul.mubr.f32.gmra.mrb[0].mxu0 %v442
        %v524 = vpop.f32.mrb[0].mxu0
        %v525 = vadd.f32 %v414, %v524
        %v526 = vpop.f32.mrb[0].mxu0
        %v527 = vadd.f32 %v418, %v526
        %528 = vmatprep.mubr.f32.mxu0 0.0
        %529 = vmatmul.mubr.f32.gmra.mrb[0].mxu0 %v443
        %v530 = vpop.f32.mrb[0].mxu0
        %v531 = vadd.f32 %v414, %v530
        %v532 = vpop.f32.mrb[0].mxu0
        %v533 = vadd.f32 %v418, %v532
        %534 = vmatprep.mubr.f32.mxu0 0.0
        %535 = vmatmul.mubr.f32.gmra.mrb[0].mxu0 %v444
        %v536 = vpop.f32.mrb[0].mxu0
        %v537 = vadd.f32 %v414, %v536
        %v538 = vpop.f32.mrb[0].mxu0
        %v539 = vadd.f32 %v418, %v538
        %540 = vmatprep.mubr.f32.mxu0 0.0
        %541 = vmatmul.mubr.f32.gmra.mrb[0].mxu0 %v445
        %v542 = vpop.f32.mrb[0].mxu0
        %v543 = vadd.f32 %v414, %v542
        %v544 = vpop.f32.mrb[0].mxu0
        %v545 = vadd.f32 %v418, %v544
        %546 = vmatprep.mubr.f32.mxu0 0.0
        %547 = vmatmul.mubr.f32.gmra.mrb[0].mxu0 %v446
        %v548 = vpop.f32.mrb[0].mxu0
        %v549 = vadd.f32 %v414, %v548
        %v550 = vpop.f32.mrb[0].mxu0
        %v551 = vadd.f32 %v418, %v550
        %552 = vmatprep.mubr.f32.mxu0 0.0
        %553 = vmatmul.mubr.f32.gmra.mrb[0].mxu0 %v447
        %v554 = vpop.f32.mrb[0].mxu0
        %v555 = vadd.f32 %v414, %v554
        %v556 = vpop.f32.mrb[0].mxu0
        %v557 = vadd.f32 %v418, %v556
        %558 = vmatprep.mubr.f32.mxu0 0.0
        %559 = vmatmul.mubr.f32.gmra.mrb[0].mxu0 %v448
        %v560 = vpop.f32.mrb[0].mxu0
        %v561 = vadd.f32 %v414, %v560
        %v562 = vpop.f32.mrb[0].mxu0
        %v563 = vadd.f32 %v418, %v562
        %564 = vmatprep.mubr.f32.mxu0 0.0
        %565 = vmatmul.mubr.f32.gmra.mrb[0].mxu0 %v449
        %v566 = vpop.f32.mrb[0].mxu0
        %v567 = vadd.f32 %v414, %v566
        %v568 = vpop.f32.mrb[0].mxu0
        %v569 = vadd.f32 %v418, %v568
        %570 = vmatprep.mubr.f32.mxu0 0.0
        %571 = vmatmul.mubr.f32.gmra.mrb[0].mxu0 %v450
        %v572 = vpop.f32.mrb[0].mxu0
        %v573 = vadd.f32 %v414, %v572
        %v574 = vpop.f32.mrb[0].mxu0
        %v575 = vadd.f32 %v418, %v574
        %576 = vmatprep.mubr.f32.mxu0 0.0
        %577 = vmatmul.mubr.f32.gmra.mrb[0].mxu0 %v451
        %v578 = vpop.f32.mrb[0].mxu0
        %v579 = vadd.f32 %v414, %v578
        %v580 = vpop.f32.mrb[0].mxu0
        %v581 = vadd.f32 %v418, %v580
        %582 = vmatprep.mubr.f32.mxu0 0.0
        %583 = vmatmul.mubr.f32.gmra.mrb[0].mxu0 %v452
        %v584 = vpop.f32.mrb[0].mxu0
        %v585 = vadd.f32 %v414, %v584
        %v586 = vpop.f32.mrb[0].mxu0
        %v587 = vadd.f32 %v418, %v586
        %588 = vmatprep.mubr.f32.mxu0 0.0
        %589 = vmatmul.mubr.f32.gmra.mrb[0].mxu0 %v453
        %v590 = vpop.f32.mrb[0].mxu0
        %v591 = vadd.f32 %v414, %v590
        %v592 = vpop.f32.mrb[0].mxu0
        %v593 = vadd.f32 %v418, %v592
        %594 = vmatprep.mubr.f32.mxu0 0.0
        %595 = vmatmul.mubr.f32.gmra.mrb[0].mxu0 %v454
        %v596 = vpop.f32.mrb[0].mxu0
        %v597 = vadd.f32 %v414, %v596
        %v598 = vpop.f32.mrb[0].mxu0
        %v599 = vadd.f32 %v418, %v598
        %600 = vmatprep.mubr.f32.mxu0 0.0
        %601 = vmatmul.mubr.f32.gmra.mrb[0].mxu0 %v455
        %v602 = vpop.f32.mrb[0].mxu0
        %v603 = vadd.f32 %v414, %v602
        %v604 = vpop.f32.mrb[0].mxu0
        %v605 = vadd.f32 %v418, %v604
        %606 = vmatprep.mubr.f32.mxu0 0.0
        %607 = vmatmul.mubr.f32.gmra.mrb[0].mxu0 %v456
        %v608 = vpop.f32.mrb[0].mxu0
        %v609 = vadd.f32 %v414, %v608
        %v610 = vpop.f32.mrb[0].mxu0
        %v611 = vadd.f32 %v418, %v610
        %612 = vmatprep.mubr.f32.mxu0 0.0
        %613 = vmatmul.mubr.f32.gmra.mrb[0].mxu0 %v457
        %v614 = vpop.f32.mrb[0].mxu0
        %v615 = vadd.f32 %v414, %v614
        %v616 = vpop.f32.mrb[0].mxu0
        %v617 = vadd.f32 %v418, %v616
        %618 = vdwg.mxu0
        %619 = vmatprep.subr.mxu0 0.0
        %620 = vmatpush1.msra.mxu0 %v363
        %621 = vmatprep.subr.mxu0 0.0
        %622 = vmatpush1.msra.mxu0 %v366
        %623 = vmatprep.subr.mxu0 0.0
        %624 = vmatpush1.msra.mxu0 %v369
        %625 = vmatprep.subr.mxu0 0.0
        %626 = vmatpush1.msra.mxu0 %v372
        %627 = vmatprep.subr.mxu0 0.0
        %628 = vmatpush1.msra.mxu0 %v375
        %629 = vmatprep.subr.mxu0 0.0
        %630 = vmatpush1.msra.mxu0 %v378
        %631 = vmatprep.subr.mxu0 0.0
        %632 = vmatpush1.msra.mxu0 %v381
        %633 = vmatprep.subr.mxu0 0.0
        %634 = vmatpush1.msra.mxu0 %v384
        %635 = vmatprep.subr.mxu0 0.0
        %636 = vmatpush1.msra.mxu0 %v387
        %637 = vmatprep.subr.mxu0 0.0
        %638 = vmatpush1.msra.mxu0 %v390
        %639 = vmatprep.subr.mxu0 0.0
        %640 = vmatpush1.msra.mxu0 %v393
        %641 = vmatprep.subr.mxu0 0.0
        %642 = vmatpush1.msra.mxu0 %v396
        %643 = vmatprep.subr.mxu0 0.0
        %644 = vmatpush1.msra.mxu0 %v399
        %645 = vmatprep.subr.mxu0 0.0
        %646 = vmatpush1.msra.mxu0 %v402
        %647 = vmatprep.subr.mxu0 0.0
        %648 = vmatpush1.msra.mxu0 %v405
        %649 = vmatprep.subr.mxu0 0.0
        %650 = vmatpush1.msra.mxu0 %v408
        %651 = vmatprep.subr.mxu0 0.0
        %652 = vmatpush1.msra.mxu0 0.0
        %653 = vmatprep.subr.mxu0 0.0
        %654 = vmatpush1.msra.mxu0 0.0
        %655 = vmatprep.subr.mxu0 0.0
        %656 = vmatpush1.msra.mxu0 0.0
        %657 = vmatprep.subr.mxu0 0.0
        %658 = vmatpush1.msra.mxu0 0.0
        %659 = vmatprep.subr.mxu0 0.0
        %660 = vmatpush1.msra.mxu0 0.0
        %661 = vmatprep.subr.mxu0 0.0
        %662 = vmatpush1.msra.mxu0 0.0
        %663 = vmatprep.subr.mxu0 0.0
        %664 = vmatpush1.msra.mxu0 0.0
        %665 = vmatprep.subr.mxu0 0.0
        %666 = vmatpush1.msra.mxu0 0.0
        %667 = vmatprep.subr.mxu0 0.0
        %668 = vmatpush1.msra.mxu0 0.0
        %669 = vmatprep.subr.mxu0 0.0
        %670 = vmatpush1.msra.mxu0 0.0
        %671 = vmatprep.subr.mxu0 0.0
        %672 = vmatpush1.msra.mxu0 0.0
        %673 = vmatprep.subr.mxu0 0.0
        %674 = vmatpush1.msra.mxu0 0.0
        %675 = vmatprep.subr.mxu0 0.0
        %676 = vmatpush1.msra.mxu0 0.0
        %677 = vmatprep.subr.mxu0 0.0
        %678 = vmatpush1.msra.mxu0 0.0
        %679 = vmatprep.subr.mxu0 0.0
        %680 = vmatpush1.msra.mxu0 0.0
        %681 = vmatprep.subr.mxu0 0.0
        %682 = vmatpush1.msra.mxu0 0.0
        %683 = vmatprep.mubr.f32.mxu0 0.0
        %684 = vmatmul.mubr.f32.gmra.mrb[0].mxu0 %v442
        %v685 = vpop.f32.mrb[0].mxu0
        %v686 = vadd.f32 %v422, %v685
        %v687 = vpop.f32.mrb[0].mxu0
        %688 = vmatprep.mubr.f32.mxu0 0.0
        %689 = vmatmul.mubr.f32.gmra.mrb[0].mxu0 %v443
        %v690 = vpop.f32.mrb[0].mxu0
        %v691 = vadd.f32 %v422, %v690
        %v692 = vpop.f32.mrb[0].mxu0
        %693 = vmatprep.mubr.f32.mxu0 0.0
        %694 = vmatmul.mubr.f32.gmra.mrb[0].mxu0 %v444
        %v695 = vpop.f32.mrb[0].mxu0
        %v696 = vadd.f32 %v422, %v695
        %v697 = vpop.f32.mrb[0].mxu0
        %698 = vmatprep.mubr.f32.mxu0 0.0
        %699 = vmatmul.mubr.f32.gmra.mrb[0].mxu0 %v445
        %v700 = vpop.f32.mrb[0].mxu0
        %v701 = vadd.f32 %v422, %v700
        %v702 = vpop.f32.mrb[0].mxu0
        %703 = vmatprep.mubr.f32.mxu0 0.0
        %704 = vmatmul.mubr.f32.gmra.mrb[0].mxu0 %v446
        %v705 = vpop.f32.mrb[0].mxu0
        %v706 = vadd.f32 %v422, %v705
        %v707 = vpop.f32.mrb[0].mxu0
        %708 = vmatprep.mubr.f32.mxu0 0.0
        %709 = vmatmul.mubr.f32.gmra.mrb[0].mxu0 %v447
        %v710 = vpop.f32.mrb[0].mxu0
        %v711 = vadd.f32 %v422, %v710
        %v712 = vpop.f32.mrb[0].mxu0
        %713 = vmatprep.mubr.f32.mxu0 0.0
        %714 = vmatmul.mubr.f32.gmra.mrb[0].mxu0 %v448
        %v715 = vpop.f32.mrb[0].mxu0
        %v716 = vadd.f32 %v422, %v715
        %v717 = vpop.f32.mrb[0].mxu0
        %718 = vmatprep.mubr.f32.mxu0 0.0
        %719 = vmatmul.mubr.f32.gmra.mrb[0].mxu0 %v449
        %v720 = vpop.f32.mrb[0].mxu0
        %v721 = vadd.f32 %v422, %v720
        %v722 = vpop.f32.mrb[0].mxu0
        %723 = vmatprep.mubr.f32.mxu0 0.0
        %724 = vmatmul.mubr.f32.gmra.mrb[0].mxu0 %v450
        %v725 = vpop.f32.mrb[0].mxu0
        %v726 = vadd.f32 %v422, %v725
        %v727 = vpop.f32.mrb[0].mxu0
        %728 = vmatprep.mubr.f32.mxu0 0.0
        %729 = vmatmul.mubr.f32.gmra.mrb[0].mxu0 %v451
        %v730 = vpop.f32.mrb[0].mxu0
        %v731 = vadd.f32 %v422, %v730
        %v732 = vpop.f32.mrb[0].mxu0
        %733 = vmatprep.mubr.f32.mxu0 0.0
        %734 = vmatmul.mubr.f32.gmra.mrb[0].mxu0 %v452
        %v735 = vpop.f32.mrb[0].mxu0
        %v736 = vadd.f32 %v422, %v735
        %v737 = vpop.f32.mrb[0].mxu0
        %738 = vmatprep.mubr.f32.mxu0 0.0
        %739 = vmatmul.mubr.f32.gmra.mrb[0].mxu0 %v453
        %v740 = vpop.f32.mrb[0].mxu0
        %v741 = vadd.f32 %v422, %v740
        %v742 = vpop.f32.mrb[0].mxu0
        %743 = vmatprep.mubr.f32.mxu0 0.0
        %744 = vmatmul.mubr.f32.gmra.mrb[0].mxu0 %v454
        %v745 = vpop.f32.mrb[0].mxu0
        %v746 = vadd.f32 %v422, %v745
        %v747 = vpop.f32.mrb[0].mxu0
        %748 = vmatprep.mubr.f32.mxu0 0.0
        %749 = vmatmul.mubr.f32.gmra.mrb[0].mxu0 %v455
        %v750 = vpop.f32.mrb[0].mxu0
        %v751 = vadd.f32 %v422, %v750
        %v752 = vpop.f32.mrb[0].mxu0
        %753 = vmatprep.mubr.f32.mxu0 0.0
        %754 = vmatmul.mubr.f32.gmra.mrb[0].mxu0 %v456
        %v755 = vpop.f32.mrb[0].mxu0
        %v756 = vadd.f32 %v422, %v755
        %v757 = vpop.f32.mrb[0].mxu0
        %758 = vmatprep.mubr.f32.mxu0 0.0
        %759 = vmatmul.mubr.f32.gmra.mrb[0].mxu0 %v457
        %v760 = vpop.f32.mrb[0].mxu0
        %v761 = vadd.f32 %v422, %v760
        %v762 = vpop.f32.mrb[0].mxu0
        %763 = vdwg.mxu0
        %764 = vst [vmem:[%s332] sm:$0xff] %v525
        %765 = vst [vmem:[%s332 + $0x8] sm:$0xff] %v531
        %766 = vst [vmem:[%s332 + $0x10] sm:$0xff] %v537
        %767 = vst [vmem:[%s332 + $0x18] sm:$0xff] %v543
        %768 = vst [vmem:[%s332 + $0x20] sm:$0xff] %v549
        %769 = vst [vmem:[%s332 + $0x28] sm:$0xff] %v555
        %770 = vst [vmem:[%s332 + $0x30] sm:$0xff] %v561
        %771 = vst [vmem:[%s332 + $0x38] sm:$0xff] %v567
        %772 = vst [vmem:[%s332 + $0x40] sm:$0xff] %v573
        %773 = vst [vmem:[%s332 + $0x48] sm:$0xff] %v579
        %774 = vst [vmem:[%s332 + $0x50] sm:$0xff] %v585
        %775 = vst [vmem:[%s332 + $0x58] sm:$0xff] %v591
        %776 = vst [vmem:[%s332 + $0x60] sm:$0xff] %v597
        %777 = vst [vmem:[%s332 + $0x68] sm:$0xff] %v603
        %778 = vst [vmem:[%s332 + $0x70] sm:$0xff] %v609
        %779 = vst [vmem:[%s332 + $0x78] sm:$0xff] %v615
        %780 = vst [vmem:[%s343] sm:$0xff] %v527
        %781 = vst [vmem:[%s343 + $0x8] sm:$0xff] %v686
        %782 = vst [vmem:[%s343 + $0x10] sm:$0xff] %v533
        %783 = vst [vmem:[%s343 + $0x18] sm:$0xff] %v691
        %784 = vst [vmem:[%s343 + $0x20] sm:$0xff] %v539
        %785 = vst [vmem:[%s343 + $0x28] sm:$0xff] %v696
        %786 = vst [vmem:[%s343 + $0x30] sm:$0xff] %v545
        %787 = vst [vmem:[%s343 + $0x38] sm:$0xff] %v701
        %788 = vst [vmem:[%s343 + $0x40] sm:$0xff] %v551
        %789 = vst [vmem:[%s343 + $0x48] sm:$0xff] %v706
        %790 = vst [vmem:[%s343 + $0x50] sm:$0xff] %v557
        %791 = vst [vmem:[%s343 + $0x58] sm:$0xff] %v711
        %792 = vst [vmem:[%s343 + $0x60] sm:$0xff] %v563
        %793 = vst [vmem:[%s343 + $0x68] sm:$0xff] %v716
        %794 = vst [vmem:[%s343 + $0x70] sm:$0xff] %v569
        %795 = vst [vmem:[%s343 + $0x78] sm:$0xff] %v721
        %796 = vst [vmem:[%s343 + $0x80] sm:$0xff] %v575
        %797 = vst [vmem:[%s343 + $0x88] sm:$0xff] %v726
        %798 = vst [vmem:[%s343 + $0x90] sm:$0xff] %v581
        %799 = vst [vmem:[%s343 + $0x98] sm:$0xff] %v731
        %800 = vst [vmem:[%s343 + $0xa0] sm:$0xff] %v587
        %801 = vst [vmem:[%s343 + $0xa8] sm:$0xff] %v736
        %802 = vst [vmem:[%s343 + $0xb0] sm:$0xff] %v593
        %803 = vst [vmem:[%s343 + $0xb8] sm:$0xff] %v741
        %804 = vst [vmem:[%s343 + $0xc0] sm:$0xff] %v599
        %805 = vst [vmem:[%s343 + $0xc8] sm:$0xff] %v746
        %806 = vst [vmem:[%s343 + $0xd0] sm:$0xff] %v605
        %807 = vst [vmem:[%s343 + $0xd8] sm:$0xff] %v751
        %808 = vst [vmem:[%s343 + $0xe0] sm:$0xff] %v611
        %809 = vst [vmem:[%s343 + $0xe8] sm:$0xff] %v756
        %810 = vst [vmem:[%s343 + $0xf0] sm:$0xff] %v617
        %811 = vst [vmem:[%s343 + $0xf8] sm:$0xff] %v761
        %s812 = smul.u32 16, %s21
        %p813 = scmp.lt.s32.totalorder %s20, 1
        %s814 = scalar_select %p813, %s20, 1
        %p815 = scmp.lt.s32.totalorder %s812, 31
        %s816 = scalar_select %p815, %s812, 31
        %s817 = smul.addr %s814, 32
        %s818 = sadd.s32 %s816, %s817
        %s819 = smul.addr %s818, 8
        %s820 = scalar_lea.vmem %s3, %s819
        %s821 = smul.u32 16, %s21
        %p822 = scmp.lt.s32.totalorder %s20, 1
        %s823 = scalar_select %p822, %s20, 1
        %p824 = scmp.lt.s32.totalorder %s821, 31
        %s825 = scalar_select %p824, %s821, 31
        %s826 = smul.addr %s825, 2
        %s827 = smul.addr %s823, 64
        %s828 = sadd.s32 %s826, %s827
        %s829 = smul.addr %s828, 8
        %s830 = scalar_lea.vmem %s4, %s829
        // Predicated region
        $region71: #{normal_self_attention_1d.2} parent=65 // pred_check
          %p831 = pneg %p118
        $region72: #{normal_self_attention_1d.2} parent=65 // pred_check_branch
          %833 = sbr.rel (%p831) target = $region74
        $region73: #{normal_self_attention_1d.2} parent=65 // pred_region
          %s834 = smul.u32 16, %s21
        $region74: #{normal_self_attention_1d.2} parent=65 // pred_fallthru
          _
        // Predicated region
        $region75: #{normal_self_attention_1d.2} parent=65 // pred_check
          %p835 = pneg %p146
        $region76: #{normal_self_attention_1d.2} parent=65 // pred_check_branch
          %837 = sbr.rel (%p835) target = $region78
        $region77: #{normal_self_attention_1d.2} parent=65 // pred_region
          %s838 = smul.u32 16, %s21
        $region78: #{normal_self_attention_1d.2} parent=65 // pred_fallthru
          _
      $region66: #{normal_self_attention_1d.2} parent=5 // pred_fallthru
        _
      %p839 = scmp.le.s32.totalorder 2, %s11
      // Predicated region
      $region79: #{normal_self_attention_1d.2} parent=5 // pred_check
        %p840 = pneg %p839
      $region80: #{normal_self_attention_1d.2} parent=5 // pred_check_branch
        %842 = sbr.rel (%p840) target = $region82
      $region81: #{normal_self_attention_1d.2} parent=5 // pred_region
        %s843 = ssub.s32 %s11, 2
        // Predicated region
        $region83: #{normal_self_attention_1d.2} parent=81 // pred_check
          %p844 = pneg %p124
        $region84: #{normal_self_attention_1d.2} parent=81 // pred_check_branch
          %846 = sbr.rel (%p844) target = $region86
        $region85: #{normal_self_attention_1d.2} parent=81 // pred_region
          %s847 = smul.u32 16, %s23
          %p848 = scmp.lt.s32.totalorder %s22, 1
          %s849 = scalar_select %p848, %s22, 1
          %p850 = scmp.lt.s32.totalorder %s847, 31
          %s851 = scalar_select %p850, %s847, 31
          %s852 = smul.addr %s849, 32
          %s853 = sadd.s32 %s851, %s852
          %s854 = smul.addr %s853, 8
          %s855 = scalar_lea.vmem %s3, %s854
        $region86: #{normal_self_attention_1d.2} parent=81 // pred_fallthru
          _
        // Predicated region
        $region87: #{normal_self_attention_1d.2} parent=81 // pred_check
          %p856 = pneg %p152
        $region88: #{normal_self_attention_1d.2} parent=81 // pred_check_branch
          %858 = sbr.rel (%p856) target = $region90
        $region89: #{normal_self_attention_1d.2} parent=81 // pred_region
          %s859 = smul.u32 16, %s23
          %p860 = scmp.lt.s32.totalorder %s22, 1
          %s861 = scalar_select %p860, %s22, 1
          %p862 = scmp.lt.s32.totalorder %s859, 31
          %s863 = scalar_select %p862, %s859, 31
          %s864 = smul.addr %s863, 2
          %s865 = smul.addr %s861, 64
          %s866 = sadd.s32 %s864, %s865
          %s867 = smul.addr %s866, 8
          %s868 = scalar_lea.vmem %s4, %s867
        $region90: #{normal_self_attention_1d.2} parent=81 // pred_fallthru
          _
      $region82: #{normal_self_attention_1d.2} parent=5 // pred_fallthru
        _
    $region6: #{normal_self_attention_1d.2} parent=1 // loop_footer
      %s15 = sadd.s32 1, %s11
    $region7: #{normal_self_attention_1d.2} parent=1 // loop_footer_branch
      %10 = sbr.rel target = $region3
    $region8: #{normal_self_attention_1d.2} parent=1 // loop_exit
      _

// kernel: normal_self_attention_1d.3
$region0: #{normal_self_attention_1d.3}
  #allocation0 [shape = 'u32[]', space=smem, size = 0x4, offset = 0x4, fixed_abs, tag = 'smem constant byte address 0x4 - core index']
  #allocation1 [shape = 'u32[144,128]{1,0:T(1,128)}', space=vmem, size = 0x12000, scoped, tag = 'internal scratch']
  #allocation2 [shape = 'f32[128,1]{1,0:T(8,128)}', space=vmem, size = 0x10000, scoped, tag = 'scratch operand']
  #allocation3 [shape = 'f32[128,1]{1,0:T(8,128)}', space=vmem, size = 0x10000, scoped, tag = 'scratch operand']
  #allocation4 [shape = 'f32[128,128]{1,0:T(8,128)}', space=vmem, size = 0x10000, scoped, tag = 'scratch operand']
  %s0 = inlined_call_operand.vmem [shape: f32[2,256,128], index: 0, kind: input, shape index: {}]
  %s1 = inlined_call_operand.vmem [shape: f32[2,256,256], index: 1, kind: input, shape index: {}]
  %s2 = inlined_call_operand.hbm [shape: f32[2,128,256], index: 2, kind: output, shape index: {}]
  %s3 = sld [smem:[#allocation0]]
  $region49: #{normal_self_attention_1d.3} parent=0
    _
  %s5 = ssub.s32 1, %s3
  %s6 = scalar_select 0, %s5, %s3
  $region1: #{normal_self_attention_1d.3} parent=0
    #allocation5 [shape = 'u8[131072]{0}', space=vmem, size = 0x20000, scoped, tag = 'output window, operand 0']
    #allocation6 [shape = 's32[2]{0}', space=sflag, size = 0x8, scoped, tag = 'scoped memory for normal_self_attention_1d.3']
    %7 = vsyncpa [#allocation6], 0
    %s8 = scalar_lea.sflag [#allocation6], 1
    %9 = vsyncpa %s8, 0
    loop: start=0, step=1, limit=10
    $region2: #{normal_self_attention_1d.3} parent=1 // loop_pre_header
      _
    $region3: #{normal_self_attention_1d.3} parent=1 // loop_header
      %s11 = sphi 0, %s15
      %p12 = scmp.ge.s32.totalorder %s11, 10
      %s18 = sphi 0, %s37
      %s19 = sphi 0, %s33
      %s20 = sphi 0, %s29
      %s21 = sphi 0, %s18
      %s22 = sphi 0, %s19
      %s23 = sphi 0, %s20
      %s24 = sphi 0, %s21
      %s25 = sphi 0, %s22
      %s26 = sphi 0, %s23
      %s42 = sphi 0, %s44
      %s45 = sphi 0, %s42
      %s46 = sphi 0, %s45
      %s62 = sphi 0, %s46
      %s70 = sphi 0, %s72
      %s73 = sphi 0, %s70
      %s74 = sphi 0, %s73
      %s90 = sphi 0, %s74
      %s98 = sphi 0, %s100
      %s101 = sphi 0, %s98
      %s102 = sphi 0, %s101
      %s118 = sphi 0, %s102
    $region4: #{normal_self_attention_1d.3} parent=1 // loop_header_branch
      %14 = sbr.rel (%p12) target = $region8
    $region5: #{normal_self_attention_1d.3} parent=1 // loop_body
      %s16 = ssub.s32 %s11, 1
      %s17 = ssub.s32 %s11, 2
      %s27 = sadd.s32 1, %s20
      %p28 = scmp.ge.s32.totalorder %s27, 2
      %s29 = scalar_select %p28, 0, %s27
      %s30 = sadd.s32 1, %s19
      %s31 = scalar_select %p28, %s30, %s19
      %p32 = scmp.ge.s32.totalorder %s31, 2
      %s33 = scalar_select %p32, 0, %s31
      %s34 = sadd.s32 1, %s18
      %s35 = scalar_select %p32, %s34, %s18
      %p36 = scmp.ge.s32.totalorder %s35, 2
      %s37 = scalar_select %p36, 0, %s35
      %s38 = ssub.s32 %s18, %s37
      %s39 = ssub.s32 %s19, %s33
      %s40 = sor.u32 %s38, %s39
      %p41 = scmp.eq.s32.totalorder %s40, 0
      %s43 = sadd.s32 %s42, 1
      %s44 = scalar_select %p41, %s42, %s43
      %p47 = pneg %p41
      %p48 = scmp.eq.s32.totalorder %s11, 7
      %p49 = por %p47, %p48
      %p50 = scmp.ne.s32.totalorder %s42, %s45
      %p51 = scmp.eq.s32.totalorder %s11, 0
      %p52 = por %p50, %p51
      %p53 = scmp.ne.s32.totalorder %s42, %s45
      %p54 = scmp.eq.s32.totalorder %s16, 7
      %p55 = por %p53, %p54
      %p56 = scmp.ne.s32.totalorder %s45, %s46
      %p57 = scmp.eq.s32.totalorder %s16, 0
      %p58 = por %p56, %p57
      %p59 = scmp.ne.s32.totalorder %s45, %s46
      %p60 = scmp.eq.s32.totalorder %s17, 7
      %p61 = por %p59, %p60
      %p63 = scmp.ne.s32.totalorder %s46, %s62
      %p64 = scmp.eq.s32.totalorder %s17, 0
      %p65 = por %p63, %p64
      %s66 = ssub.s32 %s18, %s37
      %s67 = ssub.s32 %s20, %s29
      %s68 = sor.u32 %s66, %s67
      %p69 = scmp.eq.s32.totalorder %s68, 0
      %s71 = sadd.s32 %s70, 1
      %s72 = scalar_select %p69, %s70, %s71
      %p75 = pneg %p69
      %p76 = scmp.eq.s32.totalorder %s11, 7
      %p77 = por %p75, %p76
      %p78 = scmp.ne.s32.totalorder %s70, %s73
      %p79 = scmp.eq.s32.totalorder %s11, 0
      %p80 = por %p78, %p79
      %p81 = scmp.ne.s32.totalorder %s70, %s73
      %p82 = scmp.eq.s32.totalorder %s16, 7
      %p83 = por %p81, %p82
      %p84 = scmp.ne.s32.totalorder %s73, %s74
      %p85 = scmp.eq.s32.totalorder %s16, 0
      %p86 = por %p84, %p85
      %p87 = scmp.ne.s32.totalorder %s73, %s74
      %p88 = scmp.eq.s32.totalorder %s17, 7
      %p89 = por %p87, %p88
      %p91 = scmp.ne.s32.totalorder %s74, %s90
      %p92 = scmp.eq.s32.totalorder %s17, 0
      %p93 = por %p91, %p92
      %s94 = ssub.s32 %s18, %s37
      %s95 = ssub.s32 %s19, %s33
      %s96 = sor.u32 %s94, %s95
      %p97 = scmp.eq.s32.totalorder %s96, 0
      %s99 = sadd.s32 %s98, 1
      %s100 = scalar_select %p97, %s98, %s99
      %p103 = pneg %p97
      %p104 = scmp.eq.s32.totalorder %s11, 7
      %p105 = por %p103, %p104
      %p106 = scmp.ne.s32.totalorder %s98, %s101
      %p107 = scmp.eq.s32.totalorder %s11, 0
      %p108 = por %p106, %p107
      %p109 = scmp.ne.s32.totalorder %s98, %s101
      %p110 = scmp.eq.s32.totalorder %s16, 7
      %p111 = por %p109, %p110
      %p112 = scmp.ne.s32.totalorder %s101, %s102
      %p113 = scmp.eq.s32.totalorder %s16, 0
      %p114 = por %p112, %p113
      %p115 = scmp.ne.s32.totalorder %s101, %s102
      %p116 = scmp.eq.s32.totalorder %s17, 7
      %p117 = por %p115, %p116
      %p119 = scmp.ne.s32.totalorder %s102, %s118
      %p120 = scmp.eq.s32.totalorder %s17, 0
      %p121 = por %p119, %p120
      %p122 = scmp.le.s32.totalorder 1, %s11
      %p123 = scmp.lt.s32.totalorder %s11, 9
      %p124 = pnand %p122, %p123
      %p125 = pneg %p124
      // Predicated region
      $region9: #{normal_self_attention_1d.3} parent=5 // pred_check
        _
      $region10: #{normal_self_attention_1d.3} parent=5 // pred_check_branch
        %127 = sbr.rel (%p124) target = $region12
      $region11: #{normal_self_attention_1d.3} parent=5 // pred_region
        %s128 = ssub.s32 %s11, 1
      $region12: #{normal_self_attention_1d.3} parent=5 // pred_fallthru
        _
      %p129 = scmp.lt.s32.totalorder %s11, 8
      // Predicated region
      $region13: #{normal_self_attention_1d.3} parent=5 // pred_check
        %p130 = pneg %p129
      $region14: #{normal_self_attention_1d.3} parent=5 // pred_check_branch
        %132 = sbr.rel (%p130) target = $region16
      $region15: #{normal_self_attention_1d.3} parent=5 // pred_region
        // Predicated region
        $region17: #{normal_self_attention_1d.3} parent=15 // pred_check
          %p133 = pneg %p52
        $region18: #{normal_self_attention_1d.3} parent=15 // pred_check_branch
          %135 = sbr.rel (%p133) target = $region20
        $region19: #{normal_self_attention_1d.3} parent=15 // pred_region
          %s136 = smul.u32 16, %s19
          %p137 = scmp.lt.s32.totalorder %s18, 1
          %s138 = scalar_select %p137, %s18, 1
          %p139 = scmp.lt.s32.totalorder %s136, 31
          %s140 = scalar_select %p139, %s136, 31
          %s141 = smul.addr %s138, 32
          %s142 = sadd.s32 %s140, %s141
          %s143 = smul.addr %s142, 8
          %s144 = scalar_lea.vmem %s0, %s143
          %s145 = smul.u32 16, %s19
        $region20: #{normal_self_attention_1d.3} parent=15 // pred_fallthru
          _
        // Predicated region
        $region21: #{normal_self_attention_1d.3} parent=15 // pred_check
          %p146 = pneg %p80
        $region22: #{normal_self_attention_1d.3} parent=15 // pred_check_branch
          %148 = sbr.rel (%p146) target = $region24
        $region23: #{normal_self_attention_1d.3} parent=15 // pred_region
          %s149 = smul.u32 16, %s20
          %p150 = scmp.lt.s32.totalorder %s18, 1
          %s151 = scalar_select %p150, %s18, 1
          %p152 = scmp.lt.s32.totalorder %s149, 31
          %s153 = scalar_select %p152, %s149, 31
          %s154 = smul.addr %s153, 2
          %s155 = smul.addr %s151, 64
          %s156 = sadd.s32 %s154, %s155
          %s157 = smul.addr %s156, 8
          %s158 = scalar_lea.vmem %s1, %s157
          %s159 = smul.u32 16, %s20
        $region24: #{normal_self_attention_1d.3} parent=15 // pred_fallthru
          _
      $region16: #{normal_self_attention_1d.3} parent=5 // pred_fallthru
        _
      %p160 = scmp.le.s32.totalorder 1, %s11
      %p161 = scmp.lt.s32.totalorder %s11, 9
      %p162 = pnand %p160, %p161
      %p163 = pneg %p162
      // Predicated region
      $region25: #{normal_self_attention_1d.3} parent=5 // pred_check
        _
      $region26: #{normal_self_attention_1d.3} parent=5 // pred_check_branch
        %165 = sbr.rel (%p162) target = $region28
      $region27: #{normal_self_attention_1d.3} parent=5 // pred_region
        %s166 = ssub.s32 %s11, 1
        %s167 = smul.u32 16, %s22
        %p168 = scmp.lt.s32.totalorder %s21, 1
        %s169 = scalar_select %p168, %s21, 1
        %p170 = scmp.lt.s32.totalorder %s167, 31
        %s171 = scalar_select %p170, %s167, 31
        %s172 = smul.addr %s169, 32
        %s173 = sadd.s32 %s171, %s172
        %s174 = smul.addr %s173, 8
        %s175 = scalar_lea.vmem %s0, %s174
        %p176 = pneg %p58
        %p177 = pneg %p55
        %s178 = smul.u32 16, %s23
        %p179 = scmp.lt.s32.totalorder %s21, 1
        %s180 = scalar_select %p179, %s21, 1
        %p181 = scmp.lt.s32.totalorder %s178, 31
        %s182 = scalar_select %p181, %s178, 31
        %s183 = smul.addr %s182, 2
        %s184 = smul.addr %s180, 64
        %s185 = sadd.s32 %s183, %s184
        %s186 = smul.addr %s185, 8
        %s187 = scalar_lea.vmem %s1, %s186
        %p188 = pneg %p86
        %p189 = pneg %p83
        %p190 = pneg %p114
        %p191 = pneg %p111
        %s192 = sand.u32 %s101, 1
        %s193 = scalar_lea.sflag [#allocation6], %s192
        %s194 = sand.u32 %s101, 1
        %s195 = smul.addr %s194, 128
        %s196 = scalar_lea.vmem [#allocation5], %s195
        %s197 = smul.u32 16, %s22
        %p198 = scmp.lt.s32.totalorder %s21, 1
        %s199 = scalar_select %p198, %s21, 1
        %p200 = scmp.lt.s32.totalorder %s197, 31
        %s201 = scalar_select %p200, %s197, 31
        %s202 = smul.addr %s199, 32
        %s203 = sadd.s32 %s201, %s202
        %s204 = smul.addr %s203, 8
        %s205 = scalar_lea.vmem %s0, %s204
        %s206 = smul.u32 16, %s22
        %s207 = smul.u32 16, %s23
        %p208 = scmp.lt.s32.totalorder %s21, 1
        %s209 = scalar_select %p208, %s21, 1
        %p210 = scmp.lt.s32.totalorder %s207, 31
        %s211 = scalar_select %p210, %s207, 31
        %s212 = smul.addr %s211, 2
        %s213 = smul.addr %s209, 64
        %s214 = sadd.s32 %s212, %s213
        %s215 = smul.addr %s214, 8
        %s216 = scalar_lea.vmem %s1, %s215
        %s217 = smul.u32 16, %s23
        %p218 = scmp.eq.s32.totalorder %s23, 0
        // Predicated region
        $region29: #{normal_self_attention_1d.3} parent=27 // pred_check
          %p219 = pneg %p218
        $region30: #{normal_self_attention_1d.3} parent=27 // pred_check_branch
          %221 = sbr.rel (%p219) target = $region32
        $region31: #{normal_self_attention_1d.3} parent=27 // pred_region
          %vm222 = vcmask 7168
          %223 = vst.msk [vmem:[#allocation2] sm:$0xff] %vm222, -inf
          %224 = vst.msk [vmem:[#allocation2 + $0x8] sm:$0xff] %vm222, -inf
          %225 = vst.msk [vmem:[#allocation2 + $0x10] sm:$0xff] %vm222, -inf
          %226 = vst.msk [vmem:[#allocation2 + $0x18] sm:$0xff] %vm222, -inf
          %227 = vst.msk [vmem:[#allocation2 + $0x20] sm:$0xff] %vm222, -inf
          %228 = vst.msk [vmem:[#allocation2 + $0x28] sm:$0xff] %vm222, -inf
          %229 = vst.msk [vmem:[#allocation2 + $0x30] sm:$0xff] %vm222, -inf
          %230 = vst.msk [vmem:[#allocation2 + $0x38] sm:$0xff] %vm222, -inf
          %231 = vst.msk [vmem:[#allocation2 + $0x40] sm:$0xff] %vm222, -inf
          %232 = vst.msk [vmem:[#allocation2 + $0x48] sm:$0xff] %vm222, -inf
          %233 = vst.msk [vmem:[#allocation2 + $0x50] sm:$0xff] %vm222, -inf
          %234 = vst.msk [vmem:[#allocation2 + $0x58] sm:$0xff] %vm222, -inf
          %235 = vst.msk [vmem:[#allocation2 + $0x60] sm:$0xff] %vm222, -inf
          %236 = vst.msk [vmem:[#allocation2 + $0x68] sm:$0xff] %vm222, -inf
          %237 = vst.msk [vmem:[#allocation2 + $0x70] sm:$0xff] %vm222, -inf
          %238 = vst.msk [vmem:[#allocation2 + $0x78] sm:$0xff] %vm222, -inf
          %239 = vst.msk [vmem:[#allocation3] sm:$0xff] %vm222, 0.0
          %240 = vst.msk [vmem:[#allocation3 + $0x8] sm:$0xff] %vm222, 0.0
          %241 = vst.msk [vmem:[#allocation3 + $0x10] sm:$0xff] %vm222, 0.0
          %242 = vst.msk [vmem:[#allocation3 + $0x18] sm:$0xff] %vm222, 0.0
          %243 = vst.msk [vmem:[#allocation3 + $0x20] sm:$0xff] %vm222, 0.0
          %244 = vst.msk [vmem:[#allocation3 + $0x28] sm:$0xff] %vm222, 0.0
          %245 = vst.msk [vmem:[#allocation3 + $0x30] sm:$0xff] %vm222, 0.0
          %246 = vst.msk [vmem:[#allocation3 + $0x38] sm:$0xff] %vm222, 0.0
          %247 = vst.msk [vmem:[#allocation3 + $0x40] sm:$0xff] %vm222, 0.0
          %248 = vst.msk [vmem:[#allocation3 + $0x48] sm:$0xff] %vm222, 0.0
          %249 = vst.msk [vmem:[#allocation3 + $0x50] sm:$0xff] %vm222, 0.0
          %250 = vst.msk [vmem:[#allocation3 + $0x58] sm:$0xff] %vm222, 0.0
          %251 = vst.msk [vmem:[#allocation3 + $0x60] sm:$0xff] %vm222, 0.0
          %252 = vst.msk [vmem:[#allocation3 + $0x68] sm:$0xff] %vm222, 0.0
          %253 = vst.msk [vmem:[#allocation3 + $0x70] sm:$0xff] %vm222, 0.0
          %254 = vst.msk [vmem:[#allocation3 + $0x78] sm:$0xff] %vm222, 0.0
          %255 = vst [vmem:[#allocation4] sm:$0xff] 0.0
          %256 = vst [vmem:[#allocation4 + $0x8] sm:$0xff] 0.0
          %257 = vst [vmem:[#allocation4 + $0x10] sm:$0xff] 0.0
          %258 = vst [vmem:[#allocation4 + $0x18] sm:$0xff] 0.0
          %259 = vst [vmem:[#allocation4 + $0x20] sm:$0xff] 0.0
          %260 = vst [vmem:[#allocation4 + $0x28] sm:$0xff] 0.0
          %261 = vst [vmem:[#allocation4 + $0x30] sm:$0xff] 0.0
          %262 = vst [vmem:[#allocation4 + $0x38] sm:$0xff] 0.0
          %263 = vst [vmem:[#allocation4 + $0x40] sm:$0xff] 0.0
          %264 = vst [vmem:[#allocation4 + $0x48] sm:$0xff] 0.0
          %265 = vst [vmem:[#allocation4 + $0x50] sm:$0xff] 0.0
          %266 = vst [vmem:[#allocation4 + $0x58] sm:$0xff] 0.0
          %267 = vst [vmem:[#allocation4 + $0x60] sm:$0xff] 0.0
          %268 = vst [vmem:[#allocation4 + $0x68] sm:$0xff] 0.0
          %269 = vst [vmem:[#allocation4 + $0x70] sm:$0xff] 0.0
          %270 = vst [vmem:[#allocation4 + $0x78] sm:$0xff] 0.0
        $region32: #{normal_self_attention_1d.3} parent=27 // pred_fallthru
          _
        %v271 = vld [vmem:[%s205] sm:$0xff]
        %v272 = vld [vmem:[%s205 + $0x8] sm:$0xff]
        %v273 = vld [vmem:[%s205 + $0x10] sm:$0xff]
        %v274 = vld [vmem:[%s205 + $0x18] sm:$0xff]
        %v275 = vld [vmem:[%s205 + $0x20] sm:$0xff]
        %v276 = vld [vmem:[%s205 + $0x28] sm:$0xff]
        %v277 = vld [vmem:[%s205 + $0x30] sm:$0xff]
        %v278 = vld [vmem:[%s205 + $0x38] sm:$0xff]
        %v279 = vld [vmem:[%s205 + $0x40] sm:$0xff]
        %v280 = vld [vmem:[%s205 + $0x48] sm:$0xff]
        %v281 = vld [vmem:[%s205 + $0x50] sm:$0xff]
        %v282 = vld [vmem:[%s205 + $0x58] sm:$0xff]
        %v283 = vld [vmem:[%s205 + $0x60] sm:$0xff]
        %v284 = vld [vmem:[%s205 + $0x68] sm:$0xff]
        %v285 = vld [vmem:[%s205 + $0x70] sm:$0xff]
        %v286 = vld [vmem:[%s205 + $0x78] sm:$0xff]
        %v287 = vld [vmem:[%s216] sm:$0xff]
        %v288 = vld [vmem:[%s216 + $0x8] sm:$0xff]
        %v289 = vld [vmem:[%s216 + $0x10] sm:$0xff]
        %v290 = vld [vmem:[%s216 + $0x18] sm:$0xff]
        %v291 = vld [vmem:[%s216 + $0x20] sm:$0xff]
        %v292 = vld [vmem:[%s216 + $0x28] sm:$0xff]
        %v293 = vld [vmem:[%s216 + $0x30] sm:$0xff]
        %v294 = vld [vmem:[%s216 + $0x38] sm:$0xff]
        %v295 = vld [vmem:[%s216 + $0x40] sm:$0xff]
        %v296 = vld [vmem:[%s216 + $0x48] sm:$0xff]
        %v297 = vld [vmem:[%s216 + $0x50] sm:$0xff]
        %v298 = vld [vmem:[%s216 + $0x58] sm:$0xff]
        %v299 = vld [vmem:[%s216 + $0x60] sm:$0xff]
        %v300 = vld [vmem:[%s216 + $0x68] sm:$0xff]
        %v301 = vld [vmem:[%s216 + $0x70] sm:$0xff]
        %v302 = vld [vmem:[%s216 + $0x78] sm:$0xff]
        %v303 = vld [vmem:[%s216 + $0x80] sm:$0xff]
        %v304 = vld [vmem:[%s216 + $0x88] sm:$0xff]
        %v305 = vld [vmem:[%s216 + $0x90] sm:$0xff]
        %v306 = vld [vmem:[%s216 + $0x98] sm:$0xff]
        %v307 = vld [vmem:[%s216 + $0xa0] sm:$0xff]
        %v308 = vld [vmem:[%s216 + $0xa8] sm:$0xff]
        %v309 = vld [vmem:[%s216 + $0xb0] sm:$0xff]
        %v310 = vld [vmem:[%s216 + $0xb8] sm:$0xff]
        %v311 = vld [vmem:[%s216 + $0xc0] sm:$0xff]
        %v312 = vld [vmem:[%s216 + $0xc8] sm:$0xff]
        %v313 = vld [vmem:[%s216 + $0xd0] sm:$0xff]
        %v314 = vld [vmem:[%s216 + $0xd8] sm:$0xff]
        %v315 = vld [vmem:[%s216 + $0xe0] sm:$0xff]
        %v316 = vld [vmem:[%s216 + $0xe8] sm:$0xff]
        %v317 = vld [vmem:[%s216 + $0xf0] sm:$0xff]
        %v318 = vld [vmem:[%s216 + $0xf8] sm:$0xff]
        %319 = vmatprep.subr.mxu0 0.0
        %320 = vmatpush1.xpose.msra.mxu0 %v287
        %321 = vmatprep.subr.mxu0 0.0
        %322 = vmatpush1.xpose.msra.mxu0 %v289
        %323 = vmatprep.subr.mxu0 0.0
        %324 = vmatpush1.xpose.msra.mxu0 %v291
        %325 = vmatprep.subr.mxu0 0.0
        %326 = vmatpush1.xpose.msra.mxu0 %v293
        %327 = vmatprep.subr.mxu0 0.0
        %328 = vmatpush1.xpose.msra.mxu0 %v295
        %329 = vmatprep.subr.mxu0 0.0
        %330 = vmatpush1.xpose.msra.mxu0 %v297
        %331 = vmatprep.subr.mxu0 0.0
        %332 = vmatpush1.xpose.msra.mxu0 %v299
        %333 = vmatprep.subr.mxu0 0.0
        %334 = vmatpush1.xpose.msra.mxu0 %v301
        %335 = vmatprep.subr.mxu0 0.0
        %336 = vmatpush1.xpose.msra.mxu0 %v303
        %337 = vmatprep.subr.mxu0 0.0
        %338 = vmatpush1.xpose.msra.mxu0 %v305
        %339 = vmatprep.subr.mxu0 0.0
        %340 = vmatpush1.xpose.msra.mxu0 %v307
        %341 = vmatprep.subr.mxu0 0.0
        %342 = vmatpush1.xpose.msra.mxu0 %v309
        %343 = vmatprep.subr.mxu0 0.0
        %344 = vmatpush1.xpose.msra.mxu0 %v311
        %345 = vmatprep.subr.mxu0 0.0
        %346 = vmatpush1.xpose.msra.mxu0 %v313
        %347 = vmatprep.subr.mxu0 0.0
        %348 = vmatpush1.xpose.msra.mxu0 %v315
        %349 = vmatprep.subr.mxu0 0.0
        %350 = vmatpush1.xpose.msra.mxu0 %v317
        %351 = vmatprep.subr.mxu0 0.0
        %352 = vmatpush1.xpose.msra.mxu0 0.0
        %353 = vmatprep.subr.mxu0 0.0
        %354 = vmatpush1.xpose.msra.mxu0 0.0
        %355 = vmatprep.subr.mxu0 0.0
        %356 = vmatpush1.xpose.msra.mxu0 0.0
        %357 = vmatprep.subr.mxu0 0.0
        %358 = vmatpush1.xpose.msra.mxu0 0.0
        %359 = vmatprep.subr.mxu0 0.0
        %360 = vmatpush1.xpose.msra.mxu0 0.0
        %361 = vmatprep.subr.mxu0 0.0
        %362 = vmatpush1.xpose.msra.mxu0 0.0
        %363 = vmatprep.subr.mxu0 0.0
        %364 = vmatpush1.xpose.msra.mxu0 0.0
        %365 = vmatprep.subr.mxu0 0.0
        %366 = vmatpush1.xpose.msra.mxu0 0.0
        %367 = vmatprep.subr.mxu0 0.0
        %368 = vmatpush1.xpose.msra.mxu0 0.0
        %369 = vmatprep.subr.mxu0 0.0
        %370 = vmatpush1.xpose.msra.mxu0 0.0
        %371 = vmatprep.subr.mxu0 0.0
        %372 = vmatpush1.xpose.msra.mxu0 0.0
        %373 = vmatprep.subr.mxu0 0.0
        %374 = vmatpush1.xpose.msra.mxu0 0.0
        %375 = vmatprep.subr.mxu0 0.0
        %376 = vmatpush1.xpose.msra.mxu0 0.0
        %377 = vmatprep.subr.mxu0 0.0
        %378 = vmatpush1.xpose.msra.mxu0 0.0
        %379 = vmatprep.subr.mxu0 0.0
        %380 = vmatpush1.xpose.msra.mxu0 0.0
        %381 = vmatprep.subr.mxu0 0.0
        %382 = vmatpush1.xpose.msra.mxu0 0.0
        %383 = vmatprep.mubr.f32.mxu0 0.0
        %384 = vmatmul.mubr.f32.gmra.mrb[0].mxu0 %v271
        %v385 = vpop.f32.mrb[0].mxu0
        %v386 = vadd.f32 0.0, %v385
        %v387 = vpop.f32.mrb[0].mxu0
        %388 = vmatprep.mubr.f32.mxu0 0.0
        %389 = vmatmul.mubr.f32.gmra.mrb[0].mxu0 %v272
        %v390 = vpop.f32.mrb[0].mxu0
        %v391 = vadd.f32 0.0, %v390
        %v392 = vpop.f32.mrb[0].mxu0
        %393 = vmatprep.mubr.f32.mxu0 0.0
        %394 = vmatmul.mubr.f32.gmra.mrb[0].mxu0 %v273
        %v395 = vpop.f32.mrb[0].mxu0
        %v396 = vadd.f32 0.0, %v395
        %v397 = vpop.f32.mrb[0].mxu0
        %398 = vmatprep.mubr.f32.mxu0 0.0
        %399 = vmatmul.mubr.f32.gmra.mrb[0].mxu0 %v274
        %v400 = vpop.f32.mrb[0].mxu0
        %v401 = vadd.f32 0.0, %v400
        %v402 = vpop.f32.mrb[0].mxu0
        %403 = vmatprep.mubr.f32.mxu0 0.0
        %404 = vmatmul.mubr.f32.gmra.mrb[0].mxu0 %v275
        %v405 = vpop.f32.mrb[0].mxu0
        %v406 = vadd.f32 0.0, %v405
        %v407 = vpop.f32.mrb[0].mxu0
        %408 = vmatprep.mubr.f32.mxu0 0.0
        %409 = vmatmul.mubr.f32.gmra.mrb[0].mxu0 %v276
        %v410 = vpop.f32.mrb[0].mxu0
        %v411 = vadd.f32 0.0, %v410
        %v412 = vpop.f32.mrb[0].mxu0
        %413 = vmatprep.mubr.f32.mxu0 0.0
        %414 = vmatmul.mubr.f32.gmra.mrb[0].mxu0 %v277
        %v415 = vpop.f32.mrb[0].mxu0
        %v416 = vadd.f32 0.0, %v415
        %v417 = vpop.f32.mrb[0].mxu0
        %418 = vmatprep.mubr.f32.mxu0 0.0
        %419 = vmatmul.mubr.f32.gmra.mrb[0].mxu0 %v278
        %v420 = vpop.f32.mrb[0].mxu0
        %v421 = vadd.f32 0.0, %v420
        %v422 = vpop.f32.mrb[0].mxu0
        %423 = vmatprep.mubr.f32.mxu0 0.0
        %424 = vmatmul.mubr.f32.gmra.mrb[0].mxu0 %v279
        %v425 = vpop.f32.mrb[0].mxu0
        %v426 = vadd.f32 0.0, %v425
        %v427 = vpop.f32.mrb[0].mxu0
        %428 = vmatprep.mubr.f32.mxu0 0.0
        %429 = vmatmul.mubr.f32.gmra.mrb[0].mxu0 %v280
        %v430 = vpop.f32.mrb[0].mxu0
        %v431 = vadd.f32 0.0, %v430
        %v432 = vpop.f32.mrb[0].mxu0
        %433 = vmatprep.mubr.f32.mxu0 0.0
        %434 = vmatmul.mubr.f32.gmra.mrb[0].mxu0 %v281
        %v435 = vpop.f32.mrb[0].mxu0
        %v436 = vadd.f32 0.0, %v435
        %v437 = vpop.f32.mrb[0].mxu0
        %438 = vmatprep.mubr.f32.mxu0 0.0
        %439 = vmatmul.mubr.f32.gmra.mrb[0].mxu0 %v282
        %v440 = vpop.f32.mrb[0].mxu0
        %v441 = vadd.f32 0.0, %v440
        %v442 = vpop.f32.mrb[0].mxu0
        %443 = vmatprep.mubr.f32.mxu0 0.0
        %444 = vmatmul.mubr.f32.gmra.mrb[0].mxu0 %v283
        %v445 = vpop.f32.mrb[0].mxu0
        %v446 = vadd.f32 0.0, %v445
        %v447 = vpop.f32.mrb[0].mxu0
        %448 = vmatprep.mubr.f32.mxu0 0.0
        %449 = vmatmul.mubr.f32.gmra.mrb[0].mxu0 %v284
        %v450 = vpop.f32.mrb[0].mxu0
        %v451 = vadd.f32 0.0, %v450
        %v452 = vpop.f32.mrb[0].mxu0
        %453 = vmatprep.mubr.f32.mxu0 0.0
        %454 = vmatmul.mubr.f32.gmra.mrb[0].mxu0 %v285
        %v455 = vpop.f32.mrb[0].mxu0
        %v456 = vadd.f32 0.0, %v455
        %v457 = vpop.f32.mrb[0].mxu0
        %458 = vmatprep.mubr.f32.mxu0 0.0
        %459 = vmatmul.mubr.f32.gmra.mrb[0].mxu0 %v286
        %v460 = vpop.f32.mrb[0].mxu0
        %v461 = vadd.f32 0.0, %v460
        %v462 = vpop.f32.mrb[0].mxu0
        %463 = vdwg.mxu0
        %v464 = vld [vmem:[#allocation2] sm:$0xff]
        %v465 = vld [vmem:[#allocation2 + $0x8] sm:$0xff]
        %v466 = vld [vmem:[#allocation2 + $0x10] sm:$0xff]
        %v467 = vld [vmem:[#allocation2 + $0x18] sm:$0xff]
        %v468 = vld [vmem:[#allocation2 + $0x20] sm:$0xff]
        %v469 = vld [vmem:[#allocation2 + $0x28] sm:$0xff]
        %v470 = vld [vmem:[#allocation2 + $0x30] sm:$0xff]
        %v471 = vld [vmem:[#allocation2 + $0x38] sm:$0xff]
        %v472 = vld [vmem:[#allocation2 + $0x40] sm:$0xff]
        %v473 = vld [vmem:[#allocation2 + $0x48] sm:$0xff]
        %v474 = vld [vmem:[#allocation2 + $0x50] sm:$0xff]
        %v475 = vld [vmem:[#allocation2 + $0x58] sm:$0xff]
        %v476 = vld [vmem:[#allocation2 + $0x60] sm:$0xff]
        %v477 = vld [vmem:[#allocation2 + $0x68] sm:$0xff]
        %v478 = vld [vmem:[#allocation2 + $0x70] sm:$0xff]
        %v479 = vld [vmem:[#allocation2 + $0x78] sm:$0xff]
        %480 = vmax.xlane.f32.xlu0 %v386
        %v481 = vpop.xlane.xlu0 %480
        %482 = vmax.xlane.f32.xlu0 %v391
        %v483 = vpop.xlane.xlu0 %482
        %484 = vmax.xlane.f32.xlu0 %v396
        %v485 = vpop.xlane.xlu0 %484
        %486 = vmax.xlane.f32.xlu0 %v401
        %v487 = vpop.xlane.xlu0 %486
        %488 = vmax.xlane.f32.xlu0 %v406
        %v489 = vpop.xlane.xlu0 %488
        %490 = vmax.xlane.f32.xlu0 %v411
        %v491 = vpop.xlane.xlu0 %490
        %492 = vmax.xlane.f32.xlu0 %v416
        %v493 = vpop.xlane.xlu0 %492
        %494 = vmax.xlane.f32.xlu0 %v421
        %v495 = vpop.xlane.xlu0 %494
        %496 = vmax.xlane.f32.xlu0 %v426
        %v497 = vpop.xlane.xlu0 %496
        %498 = vmax.xlane.f32.xlu0 %v431
        %v499 = vpop.xlane.xlu0 %498
        %500 = vmax.xlane.f32.xlu0 %v436
        %v501 = vpop.xlane.xlu0 %500
        %502 = vmax.xlane.f32.xlu0 %v441
        %v503 = vpop.xlane.xlu0 %502
        %504 = vmax.xlane.f32.xlu0 %v446
        %v505 = vpop.xlane.xlu0 %504
        %506 = vmax.xlane.f32.xlu0 %v451
        %v507 = vpop.xlane.xlu0 %506
        %508 = vmax.xlane.f32.xlu0 %v456
        %v509 = vpop.xlane.xlu0 %508
        %510 = vmax.xlane.f32.xlu0 %v461
        %v511 = vpop.xlane.xlu0 %510
        %v512 = vmax.f32 %v464, %v481
        %v513 = vmax.f32 %v465, %v483
        %v514 = vmax.f32 %v466, %v485
        %v515 = vmax.f32 %v467, %v487
        %v516 = vmax.f32 %v468, %v489
        %v517 = vmax.f32 %v469, %v491
        %v518 = vmax.f32 %v470, %v493
        %v519 = vmax.f32 %v471, %v495
        %v520 = vmax.f32 %v472, %v497
        %v521 = vmax.f32 %v473, %v499
        %v522 = vmax.f32 %v474, %v501
        %v523 = vmax.f32 %v475, %v503
        %v524 = vmax.f32 %v476, %v505
        %v525 = vmax.f32 %v477, %v507
        %v526 = vmax.f32 %v478, %v509
        %v527 = vmax.f32 %v479, %v511
        %v528 = vsub.f32 %v464, %v512
        %v529 = vsub.f32 %v465, %v513
        %v530 = vsub.f32 %v466, %v514
        %v531 = vsub.f32 %v467, %v515
        %v532 = vsub.f32 %v468, %v516
        %v533 = vsub.f32 %v469, %v517
        %v534 = vsub.f32 %v470, %v518
        %v535 = vsub.f32 %v471, %v519
        %v536 = vsub.f32 %v472, %v520
        %v537 = vsub.f32 %v473, %v521
        %v538 = vsub.f32 %v474, %v522
        %v539 = vsub.f32 %v475, %v523
        %v540 = vsub.f32 %v476, %v524
        %v541 = vsub.f32 %v477, %v525
        %v542 = vsub.f32 %v478, %v526
        %v543 = vsub.f32 %v479, %v527
        %v544 = vmul.f32 %v528, 1.442695
        %v545 = vpow.pop %v544
        %v546 = vmul.f32 %v529, 1.442695
        %v547 = vpow.pop %v546
        %v548 = vmul.f32 %v530, 1.442695
        %v549 = vpow.pop %v548
        %v550 = vmul.f32 %v531, 1.442695
        %v551 = vpow.pop %v550
        %v552 = vmul.f32 %v532, 1.442695
        %v553 = vpow.pop %v552
        %v554 = vmul.f32 %v533, 1.442695
        %v555 = vpow.pop %v554
        %v556 = vmul.f32 %v534, 1.442695
        %v557 = vpow.pop %v556
        %v558 = vmul.f32 %v535, 1.442695
        %v559 = vpow.pop %v558
        %v560 = vmul.f32 %v536, 1.442695
        %v561 = vpow.pop %v560
        %v562 = vmul.f32 %v537, 1.442695
        %v563 = vpow.pop %v562
        %v564 = vmul.f32 %v538, 1.442695
        %v565 = vpow.pop %v564
        %v566 = vmul.f32 %v539, 1.442695
        %v567 = vpow.pop %v566
        %v568 = vmul.f32 %v540, 1.442695
        %v569 = vpow.pop %v568
        %v570 = vmul.f32 %v541, 1.442695
        %v571 = vpow.pop %v570
        %v572 = vmul.f32 %v542, 1.442695
        %v573 = vpow.pop %v572
        %v574 = vmul.f32 %v543, 1.442695
        %v575 = vpow.pop %v574
        %577 = vset.pattern.permute.xlu0 0
        %578 = vperm.xlu0 %577, %v512
        %v579 = vpop.permute.xlu0 %578
        %582 = vset.pattern.permute.xlu0 0
        %583 = vperm.xlu0 %582, %v513
        %v584 = vpop.permute.xlu0 %583
        %587 = vset.pattern.permute.xlu0 0
        %588 = vperm.xlu0 %587, %v514
        %v589 = vpop.permute.xlu0 %588
        %592 = vset.pattern.permute.xlu0 0
        %593 = vperm.xlu0 %592, %v515
        %v594 = vpop.permute.xlu0 %593
        %597 = vset.pattern.permute.xlu0 0
        %598 = vperm.xlu0 %597, %v516
        %v599 = vpop.permute.xlu0 %598
        %602 = vset.pattern.permute.xlu0 0
        %603 = vperm.xlu0 %602, %v517
        %v604 = vpop.permute.xlu0 %603
        %607 = vset.pattern.permute.xlu0 0
        %608 = vperm.xlu0 %607, %v518
        %v609 = vpop.permute.xlu0 %608
        %612 = vset.pattern.permute.xlu0 0
        %613 = vperm.xlu0 %612, %v519
        %v614 = vpop.permute.xlu0 %613
        %617 = vset.pattern.permute.xlu0 0
        %618 = vperm.xlu0 %617, %v520
        %v619 = vpop.permute.xlu0 %618
        %622 = vset.pattern.permute.xlu0 0
        %623 = vperm.xlu0 %622, %v521
        %v624 = vpop.permute.xlu0 %623
        %627 = vset.pattern.permute.xlu0 0
        %628 = vperm.xlu0 %627, %v522
        %v629 = vpop.permute.xlu0 %628
        %632 = vset.pattern.permute.xlu0 0
        %633 = vperm.xlu0 %632, %v523
        %v634 = vpop.permute.xlu0 %633
        %637 = vset.pattern.permute.xlu0 0
        %638 = vperm.xlu0 %637, %v524
        %v639 = vpop.permute.xlu0 %638
        %642 = vset.pattern.permute.xlu0 0
        %643 = vperm.xlu0 %642, %v525
        %v644 = vpop.permute.xlu0 %643
        %647 = vset.pattern.permute.xlu0 0
        %648 = vperm.xlu0 %647, %v526
        %v649 = vpop.permute.xlu0 %648
        %652 = vset.pattern.permute.xlu0 0
        %653 = vperm.xlu0 %652, %v527
        %v654 = vpop.permute.xlu0 %653
        %v656 = vsub.f32 %v386, %v579
        %v657 = vsub.f32 %v391, %v584
        %v658 = vsub.f32 %v396, %v589
        %v659 = vsub.f32 %v401, %v594
        %v660 = vsub.f32 %v406, %v599
        %v661 = vsub.f32 %v411, %v604
        %v662 = vsub.f32 %v416, %v609
        %v663 = vsub.f32 %v421, %v614
        %v664 = vsub.f32 %v426, %v619
        %v665 = vsub.f32 %v431, %v624
        %v666 = vsub.f32 %v436, %v629
        %v667 = vsub.f32 %v441, %v634
        %v668 = vsub.f32 %v446, %v639
        %v669 = vsub.f32 %v451, %v644
        %v670 = vsub.f32 %v456, %v649
        %v671 = vsub.f32 %v461, %v654
        %v672 = vmul.f32 %v656, 1.442695
        %v673 = vpow.pop %v672
        %v674 = vmul.f32 %v657, 1.442695
        %v675 = vpow.pop %v674
        %v676 = vmul.f32 %v658, 1.442695
        %v677 = vpow.pop %v676
        %v678 = vmul.f32 %v659, 1.442695
        %v679 = vpow.pop %v678
        %v680 = vmul.f32 %v660, 1.442695
        %v681 = vpow.pop %v680
        %v682 = vmul.f32 %v661, 1.442695
        %v683 = vpow.pop %v682
        %v684 = vmul.f32 %v662, 1.442695
        %v685 = vpow.pop %v684
        %v686 = vmul.f32 %v663, 1.442695
        %v687 = vpow.pop %v686
        %v688 = vmul.f32 %v664, 1.442695
        %v689 = vpow.pop %v688
        %v690 = vmul.f32 %v665, 1.442695
        %v691 = vpow.pop %v690
        %v692 = vmul.f32 %v666, 1.442695
        %v693 = vpow.pop %v692
        %v694 = vmul.f32 %v667, 1.442695
        %v695 = vpow.pop %v694
        %v696 = vmul.f32 %v668, 1.442695
        %v697 = vpow.pop %v696
        %v698 = vmul.f32 %v669, 1.442695
        %v699 = vpow.pop %v698
        %v700 = vmul.f32 %v670, 1.442695
        %v701 = vpow.pop %v700
        %v702 = vmul.f32 %v671, 1.442695
        %v703 = vpow.pop %v702
        %v704 = vld [vmem:[#allocation3] sm:$0xff]
        %v705 = vld [vmem:[#allocation3 + $0x8] sm:$0xff]
        %v706 = vld [vmem:[#allocation3 + $0x10] sm:$0xff]
        %v707 = vld [vmem:[#allocation3 + $0x18] sm:$0xff]
        %v708 = vld [vmem:[#allocation3 + $0x20] sm:$0xff]
        %v709 = vld [vmem:[#allocation3 + $0x28] sm:$0xff]
        %v710 = vld [vmem:[#allocation3 + $0x30] sm:$0xff]
        %v711 = vld [vmem:[#allocation3 + $0x38] sm:$0xff]
        %v712 = vld [vmem:[#allocation3 + $0x40] sm:$0xff]
        %v713 = vld [vmem:[#allocation3 + $0x48] sm:$0xff]
        %v714 = vld [vmem:[#allocation3 + $0x50] sm:$0xff]
        %v715 = vld [vmem:[#allocation3 + $0x58] sm:$0xff]
        %v716 = vld [vmem:[#allocation3 + $0x60] sm:$0xff]
        %v717 = vld [vmem:[#allocation3 + $0x68] sm:$0xff]
        %v718 = vld [vmem:[#allocation3 + $0x70] sm:$0xff]
        %v719 = vld [vmem:[#allocation3 + $0x78] sm:$0xff]
        %v720 = vmul.f32 %v545, %v704
        %v721 = vmul.f32 %v547, %v705
        %v722 = vmul.f32 %v549, %v706
        %v723 = vmul.f32 %v551, %v707
        %v724 = vmul.f32 %v553, %v708
        %v725 = vmul.f32 %v555, %v709
        %v726 = vmul.f32 %v557, %v710
        %v727 = vmul.f32 %v559, %v711
        %v728 = vmul.f32 %v561, %v712
        %v729 = vmul.f32 %v563, %v713
        %v730 = vmul.f32 %v565, %v714
        %v731 = vmul.f32 %v567, %v715
        %v732 = vmul.f32 %v569, %v716
        %v733 = vmul.f32 %v571, %v717
        %v734 = vmul.f32 %v573, %v718
        %v735 = vmul.f32 %v575, %v719
        %736 = vadd.xlane.f32.xlu0 %v673
        %v737 = vpop.xlane.xlu0 %736
        %738 = vadd.xlane.f32.xlu0 %v675
        %v739 = vpop.xlane.xlu0 %738
        %740 = vadd.xlane.f32.xlu0 %v677
        %v741 = vpop.xlane.xlu0 %740
        %742 = vadd.xlane.f32.xlu0 %v679
        %v743 = vpop.xlane.xlu0 %742
        %744 = vadd.xlane.f32.xlu0 %v681
        %v745 = vpop.xlane.xlu0 %744
        %746 = vadd.xlane.f32.xlu0 %v683
        %v747 = vpop.xlane.xlu0 %746
        %748 = vadd.xlane.f32.xlu0 %v685
        %v749 = vpop.xlane.xlu0 %748
        %750 = vadd.xlane.f32.xlu0 %v687
        %v751 = vpop.xlane.xlu0 %750
        %752 = vadd.xlane.f32.xlu0 %v689
        %v753 = vpop.xlane.xlu0 %752
        %754 = vadd.xlane.f32.xlu0 %v691
        %v755 = vpop.xlane.xlu0 %754
        %756 = vadd.xlane.f32.xlu0 %v693
        %v757 = vpop.xlane.xlu0 %756
        %758 = vadd.xlane.f32.xlu0 %v695
        %v759 = vpop.xlane.xlu0 %758
        %760 = vadd.xlane.f32.xlu0 %v697
        %v761 = vpop.xlane.xlu0 %760
        %762 = vadd.xlane.f32.xlu0 %v699
        %v763 = vpop.xlane.xlu0 %762
        %764 = vadd.xlane.f32.xlu0 %v701
        %v765 = vpop.xlane.xlu0 %764
        %766 = vadd.xlane.f32.xlu0 %v703
        %v767 = vpop.xlane.xlu0 %766
        %v768 = vadd.f32 %v720, %v737
        %v769 = vadd.f32 %v721, %v739
        %v770 = vadd.f32 %v722, %v741
        %v771 = vadd.f32 %v723, %v743
        %v772 = vadd.f32 %v724, %v745
        %v773 = vadd.f32 %v725, %v747
        %v774 = vadd.f32 %v726, %v749
        %v775 = vadd.f32 %v727, %v751
        %v776 = vadd.f32 %v728, %v753
        %v777 = vadd.f32 %v729, %v755
        %v778 = vadd.f32 %v730, %v757
        %v779 = vadd.f32 %v731, %v759
        %v780 = vadd.f32 %v732, %v761
        %v781 = vadd.f32 %v733, %v763
        %v782 = vadd.f32 %v734, %v765
        %v783 = vadd.f32 %v735, %v767
        %vm784 = vcmask 7168
        %785 = vst.msk [vmem:[#allocation3] sm:$0xff] %vm784, %v768
        %786 = vst.msk [vmem:[#allocation3 + $0x8] sm:$0xff] %vm784, %v769
        %787 = vst.msk [vmem:[#allocation3 + $0x10] sm:$0xff] %vm784, %v770
        %788 = vst.msk [vmem:[#allocation3 + $0x18] sm:$0xff] %vm784, %v771
        %789 = vst.msk [vmem:[#allocation3 + $0x20] sm:$0xff] %vm784, %v772
        %790 = vst.msk [vmem:[#allocation3 + $0x28] sm:$0xff] %vm784, %v773
        %791 = vst.msk [vmem:[#allocation3 + $0x30] sm:$0xff] %vm784, %v774
        %792 = vst.msk [vmem:[#allocation3 + $0x38] sm:$0xff] %vm784, %v775
        %793 = vst.msk [vmem:[#allocation3 + $0x40] sm:$0xff] %vm784, %v776
        %794 = vst.msk [vmem:[#allocation3 + $0x48] sm:$0xff] %vm784, %v777
        %795 = vst.msk [vmem:[#allocation3 + $0x50] sm:$0xff] %vm784, %v778
        %796 = vst.msk [vmem:[#allocation3 + $0x58] sm:$0xff] %vm784, %v779
        %797 = vst.msk [vmem:[#allocation3 + $0x60] sm:$0xff] %vm784, %v780
        %798 = vst.msk [vmem:[#allocation3 + $0x68] sm:$0xff] %vm784, %v781
        %799 = vst.msk [vmem:[#allocation3 + $0x70] sm:$0xff] %vm784, %v782
        %800 = vst.msk [vmem:[#allocation3 + $0x78] sm:$0xff] %vm784, %v783
        %801 = vmatprep.subr.mxu0 0.0
        %802 = vmatpush1.msra.mxu0 %v288
        %803 = vmatprep.subr.mxu0 0.0
        %804 = vmatpush1.msra.mxu0 %v290
        %805 = vmatprep.subr.mxu0 0.0
        %806 = vmatpush1.msra.mxu0 %v292
        %807 = vmatprep.subr.mxu0 0.0
        %808 = vmatpush1.msra.mxu0 %v294
        %809 = vmatprep.subr.mxu0 0.0
        %810 = vmatpush1.msra.mxu0 %v296
        %811 = vmatprep.subr.mxu0 0.0
        %812 = vmatpush1.msra.mxu0 %v298
        %813 = vmatprep.subr.mxu0 0.0
        %814 = vmatpush1.msra.mxu0 %v300
        %815 = vmatprep.subr.mxu0 0.0
        %816 = vmatpush1.msra.mxu0 %v302
        %817 = vmatprep.subr.mxu0 0.0
        %818 = vmatpush1.msra.mxu0 %v304
        %819 = vmatprep.subr.mxu0 0.0
        %820 = vmatpush1.msra.mxu0 %v306
        %821 = vmatprep.subr.mxu0 0.0
        %822 = vmatpush1.msra.mxu0 %v308
        %823 = vmatprep.subr.mxu0 0.0
        %824 = vmatpush1.msra.mxu0 %v310
        %825 = vmatprep.subr.mxu0 0.0
        %826 = vmatpush1.msra.mxu0 %v312
        %827 = vmatprep.subr.mxu0 0.0
        %828 = vmatpush1.msra.mxu0 %v314
        %829 = vmatprep.subr.mxu0 0.0
        %830 = vmatpush1.msra.mxu0 %v316
        %831 = vmatprep.subr.mxu0 0.0
        %832 = vmatpush1.msra.mxu0 %v318
        %833 = vmatprep.subr.mxu0 0.0
        %834 = vmatpush1.msra.mxu0 0.0
        %835 = vmatprep.subr.mxu0 0.0
        %836 = vmatpush1.msra.mxu0 0.0
        %837 = vmatprep.subr.mxu0 0.0
        %838 = vmatpush1.msra.mxu0 0.0
        %839 = vmatprep.subr.mxu0 0.0
        %840 = vmatpush1.msra.mxu0 0.0
        %841 = vmatprep.subr.mxu0 0.0
        %842 = vmatpush1.msra.mxu0 0.0
        %843 = vmatprep.subr.mxu0 0.0
        %844 = vmatpush1.msra.mxu0 0.0
        %845 = vmatprep.subr.mxu0 0.0
        %846 = vmatpush1.msra.mxu0 0.0
        %847 = vmatprep.subr.mxu0 0.0
        %848 = vmatpush1.msra.mxu0 0.0
        %849 = vmatprep.subr.mxu0 0.0
        %850 = vmatpush1.msra.mxu0 0.0
        %851 = vmatprep.subr.mxu0 0.0
        %852 = vmatpush1.msra.mxu0 0.0
        %853 = vmatprep.subr.mxu0 0.0
        %854 = vmatpush1.msra.mxu0 0.0
        %855 = vmatprep.subr.mxu0 0.0
        %856 = vmatpush1.msra.mxu0 0.0
        %857 = vmatprep.subr.mxu0 0.0
        %858 = vmatpush1.msra.mxu0 0.0
        %859 = vmatprep.subr.mxu0 0.0
        %860 = vmatpush1.msra.mxu0 0.0
        %861 = vmatprep.subr.mxu0 0.0
        %862 = vmatpush1.msra.mxu0 0.0
        %863 = vmatprep.subr.mxu0 0.0
        %864 = vmatpush1.msra.mxu0 0.0
        %865 = vmatprep.mubr.f32.mxu0 0.0
        %866 = vmatmul.mubr.f32.gmra.mrb[0].mxu0 %v673
        %v867 = vpop.f32.mrb[0].mxu0
        %v868 = vadd.f32 0.0, %v867
        %v869 = vpop.f32.mrb[0].mxu0
        %870 = vmatprep.mubr.f32.mxu0 0.0
        %871 = vmatmul.mubr.f32.gmra.mrb[0].mxu0 %v675
        %v872 = vpop.f32.mrb[0].mxu0
        %v873 = vadd.f32 0.0, %v872
        %v874 = vpop.f32.mrb[0].mxu0
        %875 = vmatprep.mubr.f32.mxu0 0.0
        %876 = vmatmul.mubr.f32.gmra.mrb[0].mxu0 %v677
        %v877 = vpop.f32.mrb[0].mxu0
        %v878 = vadd.f32 0.0, %v877
        %v879 = vpop.f32.mrb[0].mxu0
        %880 = vmatprep.mubr.f32.mxu0 0.0
        %881 = vmatmul.mubr.f32.gmra.mrb[0].mxu0 %v679
        %v882 = vpop.f32.mrb[0].mxu0
        %v883 = vadd.f32 0.0, %v882
        %v884 = vpop.f32.mrb[0].mxu0
        %885 = vmatprep.mubr.f32.mxu0 0.0
        %886 = vmatmul.mubr.f32.gmra.mrb[0].mxu0 %v681
        %v887 = vpop.f32.mrb[0].mxu0
        %v888 = vadd.f32 0.0, %v887
        %v889 = vpop.f32.mrb[0].mxu0
        %890 = vmatprep.mubr.f32.mxu0 0.0
        %891 = vmatmul.mubr.f32.gmra.mrb[0].mxu0 %v683
        %v892 = vpop.f32.mrb[0].mxu0
        %v893 = vadd.f32 0.0, %v892
        %v894 = vpop.f32.mrb[0].mxu0
        %895 = vmatprep.mubr.f32.mxu0 0.0
        %896 = vmatmul.mubr.f32.gmra.mrb[0].mxu0 %v685
        %v897 = vpop.f32.mrb[0].mxu0
        %v898 = vadd.f32 0.0, %v897
        %v899 = vpop.f32.mrb[0].mxu0
        %900 = vmatprep.mubr.f32.mxu0 0.0
        %901 = vmatmul.mubr.f32.gmra.mrb[0].mxu0 %v687
        %v902 = vpop.f32.mrb[0].mxu0
        %v903 = vadd.f32 0.0, %v902
        %v904 = vpop.f32.mrb[0].mxu0
        %905 = vmatprep.mubr.f32.mxu0 0.0
        %906 = vmatmul.mubr.f32.gmra.mrb[0].mxu0 %v689
        %v907 = vpop.f32.mrb[0].mxu0
        %v908 = vadd.f32 0.0, %v907
        %v909 = vpop.f32.mrb[0].mxu0
        %910 = vmatprep.mubr.f32.mxu0 0.0
        %911 = vmatmul.mubr.f32.gmra.mrb[0].mxu0 %v691
        %v912 = vpop.f32.mrb[0].mxu0
        %v913 = vadd.f32 0.0, %v912
        %v914 = vpop.f32.mrb[0].mxu0
        %915 = vmatprep.mubr.f32.mxu0 0.0
        %916 = vmatmul.mubr.f32.gmra.mrb[0].mxu0 %v693
        %v917 = vpop.f32.mrb[0].mxu0
        %v918 = vadd.f32 0.0, %v917
        %v919 = vpop.f32.mrb[0].mxu0
        %920 = vmatprep.mubr.f32.mxu0 0.0
        %921 = vmatmul.mubr.f32.gmra.mrb[0].mxu0 %v695
        %v922 = vpop.f32.mrb[0].mxu0
        %v923 = vadd.f32 0.0, %v922
        %v924 = vpop.f32.mrb[0].mxu0
        %925 = vmatprep.mubr.f32.mxu0 0.0
        %926 = vmatmul.mubr.f32.gmra.mrb[0].mxu0 %v697
        %v927 = vpop.f32.mrb[0].mxu0
        %v928 = vadd.f32 0.0, %v927
        %v929 = vpop.f32.mrb[0].mxu0
        %930 = vmatprep.mubr.f32.mxu0 0.0
        %931 = vmatmul.mubr.f32.gmra.mrb[0].mxu0 %v699
        %v932 = vpop.f32.mrb[0].mxu0
        %v933 = vadd.f32 0.0, %v932
        %v934 = vpop.f32.mrb[0].mxu0
        %935 = vmatprep.mubr.f32.mxu0 0.0
        %936 = vmatmul.mubr.f32.gmra.mrb[0].mxu0 %v701
        %v937 = vpop.f32.mrb[0].mxu0
        %v938 = vadd.f32 0.0, %v937
        %v939 = vpop.f32.mrb[0].mxu0
        %940 = vmatprep.mubr.f32.mxu0 0.0
        %941 = vmatmul.mubr.f32.gmra.mrb[0].mxu0 %v703
        %v942 = vpop.f32.mrb[0].mxu0
        %v943 = vadd.f32 0.0, %v942
        %v944 = vpop.f32.mrb[0].mxu0
        %945 = vdwg.mxu0
        %v946 = vld [vmem:[#allocation4] sm:$0xff]
        %v947 = vld [vmem:[#allocation4 + $0x8] sm:$0xff]
        %v948 = vld [vmem:[#allocation4 + $0x10] sm:$0xff]
        %v949 = vld [vmem:[#allocation4 + $0x18] sm:$0xff]
        %v950 = vld [vmem:[#allocation4 + $0x20] sm:$0xff]
        %v951 = vld [vmem:[#allocation4 + $0x28] sm:$0xff]
        %v952 = vld [vmem:[#allocation4 + $0x30] sm:$0xff]
        %v953 = vld [vmem:[#allocation4 + $0x38] sm:$0xff]
        %v954 = vld [vmem:[#allocation4 + $0x40] sm:$0xff]
        %v955 = vld [vmem:[#allocation4 + $0x48] sm:$0xff]
        %v956 = vld [vmem:[#allocation4 + $0x50] sm:$0xff]
        %v957 = vld [vmem:[#allocation4 + $0x58] sm:$0xff]
        %v958 = vld [vmem:[#allocation4 + $0x60] sm:$0xff]
        %v959 = vld [vmem:[#allocation4 + $0x68] sm:$0xff]
        %v960 = vld [vmem:[#allocation4 + $0x70] sm:$0xff]
        %v961 = vld [vmem:[#allocation4 + $0x78] sm:$0xff]
        %963 = vset.pattern.permute.xlu0 0
        %964 = vperm.xlu0 %963, %v545
        %v965 = vpop.permute.xlu0 %964
        %968 = vset.pattern.permute.xlu0 0
        %969 = vperm.xlu0 %968, %v547
        %v970 = vpop.permute.xlu0 %969
        %973 = vset.pattern.permute.xlu0 0
        %974 = vperm.xlu0 %973, %v549
        %v975 = vpop.permute.xlu0 %974
        %978 = vset.pattern.permute.xlu0 0
        %979 = vperm.xlu0 %978, %v551
        %v980 = vpop.permute.xlu0 %979
        %983 = vset.pattern.permute.xlu0 0
        %984 = vperm.xlu0 %983, %v553
        %v985 = vpop.permute.xlu0 %984
        %988 = vset.pattern.permute.xlu0 0
        %989 = vperm.xlu0 %988, %v555
        %v990 = vpop.permute.xlu0 %989
        %993 = vset.pattern.permute.xlu0 0
        %994 = vperm.xlu0 %993, %v557
        %v995 = vpop.permute.xlu0 %994
        %998 = vset.pattern.permute.xlu0 0
        %999 = vperm.xlu0 %998, %v559
        %v1000 = vpop.permute.xlu0 %999
        %1003 = vset.pattern.permute.xlu0 0
        %1004 = vperm.xlu0 %1003, %v561
        %v1005 = vpop.permute.xlu0 %1004
        %1008 = vset.pattern.permute.xlu0 0
        %1009 = vperm.xlu0 %1008, %v563
        %v1010 = vpop.permute.xlu0 %1009
        %1013 = vset.pattern.permute.xlu0 0
        %1014 = vperm.xlu0 %1013, %v565
        %v1015 = vpop.permute.xlu0 %1014
        %1018 = vset.pattern.permute.xlu0 0
        %1019 = vperm.xlu0 %1018, %v567
        %v1020 = vpop.permute.xlu0 %1019
        %1023 = vset.pattern.permute.xlu0 0
        %1024 = vperm.xlu0 %1023, %v569
        %v1025 = vpop.permute.xlu0 %1024
        %1028 = vset.pattern.permute.xlu0 0
        %1029 = vperm.xlu0 %1028, %v571
        %v1030 = vpop.permute.xlu0 %1029
        %1033 = vset.pattern.permute.xlu0 0
        %1034 = vperm.xlu0 %1033, %v573
        %v1035 = vpop.permute.xlu0 %1034
        %1038 = vset.pattern.permute.xlu0 0
        %1039 = vperm.xlu0 %1038, %v575
        %v1040 = vpop.permute.xlu0 %1039
        %v1042 = vmul.f32 %v965, %v946
        %v1043 = vmul.f32 %v970, %v947
        %v1044 = vmul.f32 %v975, %v948
        %v1045 = vmul.f32 %v980, %v949
        %v1046 = vmul.f32 %v985, %v950
        %v1047 = vmul.f32 %v990, %v951
        %v1048 = vmul.f32 %v995, %v952
        %v1049 = vmul.f32 %v1000, %v953
        %v1050 = vmul.f32 %v1005, %v954
        %v1051 = vmul.f32 %v1010, %v955
        %v1052 = vmul.f32 %v1015, %v956
        %v1053 = vmul.f32 %v1020, %v957
        %v1054 = vmul.f32 %v1025, %v958
        %v1055 = vmul.f32 %v1030, %v959
        %v1056 = vmul.f32 %v1035, %v960
        %v1057 = vmul.f32 %v1040, %v961
        %v1058 = vadd.f32 %v1042, %v868
        %v1059 = vadd.f32 %v1043, %v873
        %v1060 = vadd.f32 %v1044, %v878
        %v1061 = vadd.f32 %v1045, %v883
        %v1062 = vadd.f32 %v1046, %v888
        %v1063 = vadd.f32 %v1047, %v893
        %v1064 = vadd.f32 %v1048, %v898
        %v1065 = vadd.f32 %v1049, %v903
        %v1066 = vadd.f32 %v1050, %v908
        %v1067 = vadd.f32 %v1051, %v913
        %v1068 = vadd.f32 %v1052, %v918
        %v1069 = vadd.f32 %v1053, %v923
        %v1070 = vadd.f32 %v1054, %v928
        %v1071 = vadd.f32 %v1055, %v933
        %v1072 = vadd.f32 %v1056, %v938
        %v1073 = vadd.f32 %v1057, %v943
        %1074 = vst [vmem:[#allocation4] sm:$0xff] %v1058
        %1075 = vst [vmem:[#allocation4 + $0x8] sm:$0xff] %v1059
        %1076 = vst [vmem:[#allocation4 + $0x10] sm:$0xff] %v1060
        %1077 = vst [vmem:[#allocation4 + $0x18] sm:$0xff] %v1061
        %1078 = vst [vmem:[#allocation4 + $0x20] sm:$0xff] %v1062
        %1079 = vst [vmem:[#allocation4 + $0x28] sm:$0xff] %v1063
        %1080 = vst [vmem:[#allocation4 + $0x30] sm:$0xff] %v1064
        %1081 = vst [vmem:[#allocation4 + $0x38] sm:$0xff] %v1065
        %1082 = vst [vmem:[#allocation4 + $0x40] sm:$0xff] %v1066
        %1083 = vst [vmem:[#allocation4 + $0x48] sm:$0xff] %v1067
        %1084 = vst [vmem:[#allocation4 + $0x50] sm:$0xff] %v1068
        %1085 = vst [vmem:[#allocation4 + $0x58] sm:$0xff] %v1069
        %1086 = vst [vmem:[#allocation4 + $0x60] sm:$0xff] %v1070
        %1087 = vst [vmem:[#allocation4 + $0x68] sm:$0xff] %v1071
        %1088 = vst [vmem:[#allocation4 + $0x70] sm:$0xff] %v1072
        %1089 = vst [vmem:[#allocation4 + $0x78] sm:$0xff] %v1073
        %1090 = vst.msk [vmem:[#allocation2] sm:$0xff] %vm784, %v512
        %1091 = vst.msk [vmem:[#allocation2 + $0x8] sm:$0xff] %vm784, %v513
        %1092 = vst.msk [vmem:[#allocation2 + $0x10] sm:$0xff] %vm784, %v514
        %1093 = vst.msk [vmem:[#allocation2 + $0x18] sm:$0xff] %vm784, %v515
        %1094 = vst.msk [vmem:[#allocation2 + $0x20] sm:$0xff] %vm784, %v516
        %1095 = vst.msk [vmem:[#allocation2 + $0x28] sm:$0xff] %vm784, %v517
        %1096 = vst.msk [vmem:[#allocation2 + $0x30] sm:$0xff] %vm784, %v518
        %1097 = vst.msk [vmem:[#allocation2 + $0x38] sm:$0xff] %vm784, %v519
        %1098 = vst.msk [vmem:[#allocation2 + $0x40] sm:$0xff] %vm784, %v520
        %1099 = vst.msk [vmem:[#allocation2 + $0x48] sm:$0xff] %vm784, %v521
        %1100 = vst.msk [vmem:[#allocation2 + $0x50] sm:$0xff] %vm784, %v522
        %1101 = vst.msk [vmem:[#allocation2 + $0x58] sm:$0xff] %vm784, %v523
        %1102 = vst.msk [vmem:[#allocation2 + $0x60] sm:$0xff] %vm784, %v524
        %1103 = vst.msk [vmem:[#allocation2 + $0x68] sm:$0xff] %vm784, %v525
        %1104 = vst.msk [vmem:[#allocation2 + $0x70] sm:$0xff] %vm784, %v526
        %1105 = vst.msk [vmem:[#allocation2 + $0x78] sm:$0xff] %vm784, %v527
        %p1106 = scmp.eq.s32.totalorder %s23, 1
        // Predicated region
        $region33: #{normal_self_attention_1d.3} parent=27 // pred_check
          %p1107 = pneg %p1106
        $region34: #{normal_self_attention_1d.3} parent=27 // pred_check_branch
          %1109 = sbr.rel (%p1107) target = $region36
        $region35: #{normal_self_attention_1d.3} parent=27 // pred_region
          %v1110 = vld [vmem:[#allocation3] sm:$0xff]
          %v1111 = vld [vmem:[#allocation3 + $0x8] sm:$0xff]
          %v1112 = vld [vmem:[#allocation3 + $0x10] sm:$0xff]
          %v1113 = vld [vmem:[#allocation3 + $0x18] sm:$0xff]
          %v1114 = vld [vmem:[#allocation3 + $0x20] sm:$0xff]
          %v1115 = vld [vmem:[#allocation3 + $0x28] sm:$0xff]
          %v1116 = vld [vmem:[#allocation3 + $0x30] sm:$0xff]
          %v1117 = vld [vmem:[#allocation3 + $0x38] sm:$0xff]
          %v1118 = vld [vmem:[#allocation3 + $0x40] sm:$0xff]
          %v1119 = vld [vmem:[#allocation3 + $0x48] sm:$0xff]
          %v1120 = vld [vmem:[#allocation3 + $0x50] sm:$0xff]
          %v1121 = vld [vmem:[#allocation3 + $0x58] sm:$0xff]
          %v1122 = vld [vmem:[#allocation3 + $0x60] sm:$0xff]
          %v1123 = vld [vmem:[#allocation3 + $0x68] sm:$0xff]
          %v1124 = vld [vmem:[#allocation3 + $0x70] sm:$0xff]
          %v1125 = vld [vmem:[#allocation3 + $0x78] sm:$0xff]
          %v1126 = vrcp.pop %v1110
          %v1127 = vrcp.pop %v1111
          %v1128 = vrcp.pop %v1112
          %v1129 = vrcp.pop %v1113
          %v1130 = vrcp.pop %v1114
          %v1131 = vrcp.pop %v1115
          %v1132 = vrcp.pop %v1116
          %v1133 = vrcp.pop %v1117
          %v1134 = vrcp.pop %v1118
          %v1135 = vrcp.pop %v1119
          %v1136 = vrcp.pop %v1120
          %v1137 = vrcp.pop %v1121
          %v1138 = vrcp.pop %v1122
          %v1139 = vrcp.pop %v1123
          %v1140 = vrcp.pop %v1124
          %v1141 = vrcp.pop %v1125
          %v1142 = vld [vmem:[#allocation4] sm:$0xff]
          %v1143 = vld [vmem:[#allocation4 + $0x8] sm:$0xff]
          %v1144 = vld [vmem:[#allocation4 + $0x10] sm:$0xff]
          %v1145 = vld [vmem:[#allocation4 + $0x18] sm:$0xff]
          %v1146 = vld [vmem:[#allocation4 + $0x20] sm:$0xff]
          %v1147 = vld [vmem:[#allocation4 + $0x28] sm:$0xff]
          %v1148 = vld [vmem:[#allocation4 + $0x30] sm:$0xff]
          %v1149 = vld [vmem:[#allocation4 + $0x38] sm:$0xff]
          %v1150 = vld [vmem:[#allocation4 + $0x40] sm:$0xff]
          %v1151 = vld [vmem:[#allocation4 + $0x48] sm:$0xff]
          %v1152 = vld [vmem:[#allocation4 + $0x50] sm:$0xff]
          %v1153 = vld [vmem:[#allocation4 + $0x58] sm:$0xff]
          %v1154 = vld [vmem:[#allocation4 + $0x60] sm:$0xff]
          %v1155 = vld [vmem:[#allocation4 + $0x68] sm:$0xff]
          %v1156 = vld [vmem:[#allocation4 + $0x70] sm:$0xff]
          %v1157 = vld [vmem:[#allocation4 + $0x78] sm:$0xff]
          %1159 = vset.pattern.permute.xlu0 0
          %1160 = vperm.xlu0 %1159, %v1126
          %v1161 = vpop.permute.xlu0 %1160
          %1164 = vset.pattern.permute.xlu0 0
          %1165 = vperm.xlu0 %1164, %v1127
          %v1166 = vpop.permute.xlu0 %1165
          %1169 = vset.pattern.permute.xlu0 0
          %1170 = vperm.xlu0 %1169, %v1128
          %v1171 = vpop.permute.xlu0 %1170
          %1174 = vset.pattern.permute.xlu0 0
          %1175 = vperm.xlu0 %1174, %v1129
          %v1176 = vpop.permute.xlu0 %1175
          %1179 = vset.pattern.permute.xlu0 0
          %1180 = vperm.xlu0 %1179, %v1130
          %v1181 = vpop.permute.xlu0 %1180
          %1184 = vset.pattern.permute.xlu0 0
          %1185 = vperm.xlu0 %1184, %v1131
          %v1186 = vpop.permute.xlu0 %1185
          %1189 = vset.pattern.permute.xlu0 0
          %1190 = vperm.xlu0 %1189, %v1132
          %v1191 = vpop.permute.xlu0 %1190
          %1194 = vset.pattern.permute.xlu0 0
          %1195 = vperm.xlu0 %1194, %v1133
          %v1196 = vpop.permute.xlu0 %1195
          %1199 = vset.pattern.permute.xlu0 0
          %1200 = vperm.xlu0 %1199, %v1134
          %v1201 = vpop.permute.xlu0 %1200
          %1204 = vset.pattern.permute.xlu0 0
          %1205 = vperm.xlu0 %1204, %v1135
          %v1206 = vpop.permute.xlu0 %1205
          %1209 = vset.pattern.permute.xlu0 0
          %1210 = vperm.xlu0 %1209, %v1136
          %v1211 = vpop.permute.xlu0 %1210
          %1214 = vset.pattern.permute.xlu0 0
          %1215 = vperm.xlu0 %1214, %v1137
          %v1216 = vpop.permute.xlu0 %1215
          %1219 = vset.pattern.permute.xlu0 0
          %1220 = vperm.xlu0 %1219, %v1138
          %v1221 = vpop.permute.xlu0 %1220
          %1224 = vset.pattern.permute.xlu0 0
          %1225 = vperm.xlu0 %1224, %v1139
          %v1226 = vpop.permute.xlu0 %1225
          %1229 = vset.pattern.permute.xlu0 0
          %1230 = vperm.xlu0 %1229, %v1140
          %v1231 = vpop.permute.xlu0 %1230
          %1234 = vset.pattern.permute.xlu0 0
          %1235 = vperm.xlu0 %1234, %v1141
          %v1236 = vpop.permute.xlu0 %1235
          %v1238 = vmul.f32 %v1142, %v1161
          %v1239 = vmul.f32 %v1143, %v1166
          %v1240 = vmul.f32 %v1144, %v1171
          %v1241 = vmul.f32 %v1145, %v1176
          %v1242 = vmul.f32 %v1146, %v1181
          %v1243 = vmul.f32 %v1147, %v1186
          %v1244 = vmul.f32 %v1148, %v1191
          %v1245 = vmul.f32 %v1149, %v1196
          %v1246 = vmul.f32 %v1150, %v1201
          %v1247 = vmul.f32 %v1151, %v1206
          %v1248 = vmul.f32 %v1152, %v1211
          %v1249 = vmul.f32 %v1153, %v1216
          %v1250 = vmul.f32 %v1154, %v1221
          %v1251 = vmul.f32 %v1155, %v1226
          %v1252 = vmul.f32 %v1156, %v1231
          %v1253 = vmul.f32 %v1157, %v1236
          %1254 = vxpose.xlu0.b32.start [1/16] %v1238, 128
          %1255 = vxpose.xlu0.b32.cont [2/16] %v1239, 128
          %1256 = vxpose.xlu0.b32.cont [3/16] %v1240, 128
          %1257 = vxpose.xlu0.b32.cont [4/16] %v1241, 128
          %1258 = vxpose.xlu0.b32.cont [5/16] %v1242, 128
          %1259 = vxpose.xlu0.b32.cont [6/16] %v1243, 128
          %1260 = vxpose.xlu0.b32.cont [7/16] %v1244, 128
          %1261 = vxpose.xlu0.b32.cont [8/16] %v1245, 128
          %1262 = vxpose.xlu0.b32.cont [9/16] %v1246, 128
          %1263 = vxpose.xlu0.b32.cont [10/16] %v1247, 128
          %1264 = vxpose.xlu0.b32.cont [11/16] %v1248, 128
          %1265 = vxpose.xlu0.b32.cont [12/16] %v1249, 128
          %1266 = vxpose.xlu0.b32.cont [13/16] %v1250, 128
          %1267 = vxpose.xlu0.b32.cont [14/16] %v1251, 128
          %1268 = vxpose.xlu0.b32.cont [15/16] %v1252, 128
          %1269 = vxpose.xlu0.b32.end [16/16] %v1253, 128
          %v1270 = vpop.trf.xlu0
          %v1271 = vpop.trf.xlu0
          %v1272 = vpop.trf.xlu0
          %v1273 = vpop.trf.xlu0
          %v1274 = vpop.trf.xlu0
          %v1275 = vpop.trf.xlu0
          %v1276 = vpop.trf.xlu0
          %v1277 = vpop.trf.xlu0
          %v1278 = vpop.trf.xlu0
          %v1279 = vpop.trf.xlu0
          %v1280 = vpop.trf.xlu0
          %v1281 = vpop.trf.xlu0
          %v1282 = vpop.trf.xlu0
          %v1283 = vpop.trf.xlu0
          %v1284 = vpop.trf.xlu0
          %v1285 = vpop.trf.xlu0
          %1286 = vst [vmem:[%s196] sm:$0xff] %v1270
          %1287 = vst [vmem:[%s196 + $0x8] sm:$0xff] %v1271
          %1288 = vst [vmem:[%s196 + $0x10] sm:$0xff] %v1272
          %1289 = vst [vmem:[%s196 + $0x18] sm:$0xff] %v1273
          %1290 = vst [vmem:[%s196 + $0x20] sm:$0xff] %v1274
          %1291 = vst [vmem:[%s196 + $0x28] sm:$0xff] %v1275
          %1292 = vst [vmem:[%s196 + $0x30] sm:$0xff] %v1276
          %1293 = vst [vmem:[%s196 + $0x38] sm:$0xff] %v1277
          %1294 = vst [vmem:[%s196 + $0x40] sm:$0xff] %v1278
          %1295 = vst [vmem:[%s196 + $0x48] sm:$0xff] %v1279
          %1296 = vst [vmem:[%s196 + $0x50] sm:$0xff] %v1280
          %1297 = vst [vmem:[%s196 + $0x58] sm:$0xff] %v1281
          %1298 = vst [vmem:[%s196 + $0x60] sm:$0xff] %v1282
          %1299 = vst [vmem:[%s196 + $0x68] sm:$0xff] %v1283
          %1300 = vst [vmem:[%s196 + $0x70] sm:$0xff] %v1284
          %1301 = vst [vmem:[%s196 + $0x78] sm:$0xff] %v1285
        $region36: #{normal_self_attention_1d.3} parent=27 // pred_fallthru
          _
        %s1302 = sand.u32 %s101, 1
        %s1303 = scalar_lea.sflag [#allocation6], %s1302
        %s1304 = sand.u32 %s101, 1
        %s1305 = smul.addr %s1304, 128
        %s1306 = scalar_lea.vmem [#allocation5], %s1305
        // Predicated region
        $region37: #{normal_self_attention_1d.3} parent=27 // pred_check
          %p1307 = pneg %p111
        $region38: #{normal_self_attention_1d.3} parent=27 // pred_check_branch
          %1309 = sbr.rel (%p1307) target = $region40
        $region39: #{normal_self_attention_1d.3} parent=27 // pred_region
          %s1311 = ssub.s32 2048, 2048
          %1312 = vsyncadd %s1303, %s1311
          %s1313 = smul.addr %s21, 32
          %s1314 = sadd.s32 %s22, %s1313
          %s1315 = smul.addr %s1314, 128
          %s1316 = scalar_lea.hbm %s2, %s1315
          %s1317 = sshll.u32 %s1306, 4
          %s1318 = int_to_ptr.vmem [resolvable:$true] %s1317
          %1323 = dma.vmem_to_hbm [thread:$0]  %s1318, 2048, %s1316, %s1303, 128, 256, 8
        $region40: #{normal_self_attention_1d.3} parent=27 // pred_fallthru
          _
      $region28: #{normal_self_attention_1d.3} parent=5 // pred_fallthru
        _
      %p1324 = scmp.le.s32.totalorder 2, %s11
      // Predicated region
      $region41: #{normal_self_attention_1d.3} parent=5 // pred_check
        %p1325 = pneg %p1324
      $region42: #{normal_self_attention_1d.3} parent=5 // pred_check_branch
        %1327 = sbr.rel (%p1325) target = $region44
      $region43: #{normal_self_attention_1d.3} parent=5 // pred_region
        %s1328 = ssub.s32 %s11, 2
        // Predicated region
        $region45: #{normal_self_attention_1d.3} parent=43 // pred_check
          %p1329 = pneg %p117
        $region46: #{normal_self_attention_1d.3} parent=43 // pred_check_branch
          %1331 = sbr.rel (%p1329) target = $region48
        $region47: #{normal_self_attention_1d.3} parent=43 // pred_region
          %s1332 = sand.u32 %s102, 1
          %s1333 = scalar_lea.sflag [#allocation6], %s1332
          %s1334 = sand.u32 %s102, 1
          %s1335 = smul.addr %s1334, 128
          %s1336 = scalar_lea.vmem [#allocation5], %s1335
          %1337 = dma.done %s1333, 2048
        $region48: #{normal_self_attention_1d.3} parent=43 // pred_fallthru
          _
      $region44: #{normal_self_attention_1d.3} parent=5 // pred_fallthru
        _
    $region6: #{normal_self_attention_1d.3} parent=1 // loop_footer
      %s15 = sadd.s32 1, %s11
    $region7: #{normal_self_attention_1d.3} parent=1 // loop_footer_branch
      %10 = sbr.rel target = $region3
    $region8: #{normal_self_attention_1d.3} parent=1 // loop_exit
      _
    %1338 = vsyncpa [#allocation6], 1
    %s1339 = scalar_lea.sflag [#allocation6], 1
    %1340 = vsyncpa %s1339, 1

</llo_original>
